<compile_context>
chip_gen: v7x
topology: tpu7x:2x2x1
jax: 0.10.0
libtpu: 0.0.40
codegen_flags: <defaults>
</compile_context>

<pallas_src>
import functools

import jax
import jax.numpy as jnp
from jax.experimental import pallas as pl
from jax.experimental.pallas import tpu as pltpu


def _round_up(x, m):
    return ((x + m - 1) // m) * m


def _block_diag(blocks):
    rows = sum(b.shape[0] for b in blocks)
    cols = sum(b.shape[1] for b in blocks)
    out = jnp.zeros((rows, cols), jnp.float32)
    r = c = 0
    for b in blocks:
        out = out.at[r:r + b.shape[0], c:c + b.shape[1]].set(b)
        r += b.shape[0]
        c += b.shape[1]
    return out


# ----------------------------- fused Pallas kernel ---------------------------
def _fused_kernel(num_expert, num_outputs,
                  x_ref,
                  wp0_ref, bp0_ref, wp1_ref, bp1_ref, wp2_ref,
                  wg0_ref, bg0_ref, wg1_ref, bg1_ref, wg2_ref,
                  bh_ref,
                  out_ref):
    """Whole forward pass for one batch tile into a single lane-dense slab.

    Output lane layout: [0, E*no) = tanh(policy) for all experts (concatenated),
    lane E*no = value, lanes [E*no+1, E*no+1+E) = softmax gate, rest = pad.
    """
    xb = x_ref[...].astype(jnp.bfloat16)                 # bf16 MXU inputs

    # ---- policy branch: all experts packed along N (layer 1 block-diag) ----
    h = jnp.dot(xb, wp0_ref[...], preferred_element_type=jnp.float32) + bp0_ref[...]
    h = jnp.maximum(h, 0.0).astype(jnp.bfloat16)
    h = jnp.dot(h, wp1_ref[...], preferred_element_type=jnp.float32) + bp1_ref[...]
    h = jnp.maximum(h, 0.0).astype(jnp.bfloat16)

    # ---- value + gating branch: v-net and w-net fused along N ----
    g = jnp.dot(xb, wg0_ref[...], preferred_element_type=jnp.float32) + bg0_ref[...]
    g = jnp.maximum(g, 0.0).astype(jnp.bfloat16)
    g = jnp.dot(g, wg1_ref[...], preferred_element_type=jnp.float32) + bg1_ref[...]
    g = jnp.maximum(g, 0.0).astype(jnp.bfloat16)

    # ---- merged head: both branches write disjoint columns of one slab ----
    z = (jnp.dot(h, wp2_ref[...], preferred_element_type=jnp.float32)
         + jnp.dot(g, wg2_ref[...], preferred_element_type=jnp.float32)
         + bh_ref[...])

    pol_w = num_expert * num_outputs
    col = jax.lax.broadcasted_iota(jnp.int32, z.shape, dimension=1)

    # Gate softmax over lanes [pol_w+1, pol_w+1+E).
    gate_mask = (col >= pol_w + 1) & (col < pol_w + 1 + num_expert)
    logits = jnp.where(gate_mask, z, jnp.float32(-1e30))
    m = jnp.max(logits, axis=-1, keepdims=True)
    e = jnp.where(gate_mask, jnp.exp(logits - m), 0.0)
    denom = jnp.sum(e, axis=-1, keepdims=True)
    w_soft = e / denom                                   # exact normalization

    out = jnp.where(col < pol_w, jnp.tanh(z),            # policy lanes
                    jnp.where(col == pol_w, z,           # value lane (identity)
                              w_soft))                   # gate lanes (pad lanes -> 0)
    out_ref[...] = out


def _fused_forward(x, packed, num_expert, num_outputs, slab_w):
    """Single pallas_call for the whole network. Returns the (B, slab_w) slab."""
    B, nin = x.shape
    # Batch tiling:
    #   * B <= 512  -> one block (whole batch), minimal per-step overhead.
    #   * B  > 512  -> tiles of up to 1024 rows, chosen so the grid has >= 2
    #     blocks (v7x megacore sharding via the "parallel" axis).
    if B <= 512:
        bt = B
    else:
        bt = min(1024, _round_up(-(-B // 2), 256))
    Bp = _round_up(B, bt)
    if Bp != B:
        x = jnp.pad(x, ((0, Bp - B), (0, 0)))
    nblocks = Bp // bt

    in_specs = [pl.BlockSpec((bt, nin), lambda i: (i, 0))]
    # Weights/biases stay VMEM-resident across the (parallel) batch grid.
    in_specs += [pl.BlockSpec(w.shape, lambda i: (0, 0)) for w in packed]
    out_specs = pl.BlockSpec((bt, slab_w), lambda i: (i, 0))
    out_shape = jax.ShapeDtypeStruct((Bp, slab_w), jnp.float32)

    kernel = functools.partial(_fused_kernel, num_expert, num_outputs)
    out = pl.pallas_call(
        kernel,
        grid=(nblocks,),
        in_specs=in_specs,
        out_specs=out_specs,
        out_shape=out_shape,
        compiler_params=pltpu.CompilerParams(
            dimension_semantics=("parallel",),
            vmem_limit_bytes=32 * 1024 * 1024),
    )(x, *packed)

    if Bp != B:
        out = out[:B]
    return out


# --------------------------- parameter creation ------------------------------
def init_linear(key, fan_in, fan_out):
    """Deterministic nn.Linear-style init: U(-1/sqrt(fan_in), 1/sqrt(fan_in))."""
    k1, k2 = jax.random.split(key)
    bound = 1.0 / float(jnp.sqrt(jnp.float32(fan_in)))
    w = jax.random.uniform(k1, (fan_in, fan_out), jnp.float32, -bound, bound)
    b = jax.random.uniform(k2, (1, fan_out), jnp.float32, -bound, bound)
    return w, b


def init_mlp3(key, dims):
    """dims = [in, h0, h1, out] -> (w0, b0, w1, b1, w2, b2)."""
    keys = jax.random.split(key, 3)
    w0, b0 = init_linear(keys[0], dims[0], dims[1])
    w1, b1 = init_linear(keys[1], dims[1], dims[2])
    w2, b2 = init_linear(keys[2], dims[2], dims[3])
    return (w0, b0, w1, b1, w2, b2)


class ActorCriticNetMixtureExpertPallas:
    def __init__(self, key, num_inputs, num_outputs,
                 hidden_layer=(64, 64), v_hidden_layer=(256, 256),
                 w_hidden_layer=(256, 256), num_expert=1):
        self.num_expert = num_expert
        self.num_outputs = num_outputs
        keys = jax.random.split(key, num_expert + 2)
        # Per-expert policy branch: num_inputs -> h0 -> h1 -> num_outputs (tanh)
        self.expert_params = [
            init_mlp3(keys[i],
                      [num_inputs, hidden_layer[0], hidden_layer[1], num_outputs])
            for i in range(num_expert)
        ]
        # Value net: num_inputs -> 256 -> 256 -> 1 (identity)
        self.v_params = init_mlp3(
            keys[num_expert],
            [num_inputs, v_hidden_layer[0], v_hidden_layer[1], 1])
        # Gating net: num_inputs -> 256 -> 256 -> num_expert (softmax)
        self.w_params = init_mlp3(
            keys[num_expert + 1],
            [num_inputs, w_hidden_layer[0], w_hidden_layer[1], num_expert])
        # log_std parameter exists in the module but is not used by forward().
        self.log_std = jnp.ones((num_outputs,), jnp.float32) * -1.0
        self._pack()

    def _pack(self):
        """Build packed (concat / block-diagonal) bf16 weights for the fused kernel."""
        E, no = self.num_expert, self.num_outputs
        bf16 = jnp.bfloat16

        # ---- policy branch: experts concatenated along N, block-diag layer 1 ----
        wp0 = jnp.concatenate([p[0] for p in self.expert_params], axis=1)
        bp0 = jnp.concatenate([p[1] for p in self.expert_params], axis=1)
        wp1 = _block_diag([p[2] for p in self.expert_params])
        bp1 = jnp.concatenate([p[3] for p in self.expert_params], axis=1)

        # ---- merged lane-dense output slab layout ----
        #   lanes [0, E*no)          : policy (all experts)
        #   lane  E*no               : value
        #   lanes [E*no+1, E*no+1+E) : gate logits
        pol_w = E * no
        self.slab_w = max(128, _round_up(pol_w + 1 + E, 128))

        # Policy head -> columns [0, pol_w) of the slab.
        wp2 = _block_diag([p[4] for p in self.expert_params])          # (E*h1, E*no)
        wp2 = jnp.pad(wp2, ((0, 0), (0, self.slab_w - wp2.shape[1])))

        # ---- value + gate branch: fuse the two identical-shape 256-wide MLPs ----
        v0w, v0b, v1w, v1b, v2w, v2b = self.v_params
        g0w, g0b, g1w, g1b, g2w, g2b = self.w_params
        wg0 = jnp.concatenate([v0w, g0w], axis=1)          # (in, 512)
        bg0 = jnp.concatenate([v0b, g0b], axis=1)
        wg1 = _block_diag([v1w, g1w])                      # (512, 512)
        bg1 = jnp.concatenate([v1b, g1b], axis=1)

        v_h, w_h = v2w.shape[0], g2w.shape[0]
        wg2 = jnp.zeros((v_h + w_h, self.slab_w), jnp.float32)
        wg2 = wg2.at[:v_h, pol_w:pol_w + 1].set(v2w)               # value column
        wg2 = wg2.at[v_h:, pol_w + 1:pol_w + 1 + E].set(g2w)       # gate columns

        # Combined head bias (kept in f32).
        bh = jnp.zeros((1, self.slab_w), jnp.float32)
        bh = bh.at[0, :pol_w].set(
            jnp.concatenate([p[5] for p in self.expert_params], axis=1)[0])
        bh = bh.at[0, pol_w].set(v2b[0, 0])
        bh = bh.at[0, pol_w + 1:pol_w + 1 + E].set(g2b[0])

        # Matmul weights in bf16 (f32 accumulation in-kernel); biases stay f32.
        self.packed = (wp0.astype(bf16), bp0, wp1.astype(bf16), bp1, wp2.astype(bf16),
                       wg0.astype(bf16), bg0, wg1.astype(bf16), bg1, wg2.astype(bf16),
                       bh)

    def forward(self, x):
        out = _fused_forward(x, self.packed, self.num_expert,
                             self.num_outputs, self.slab_w)
        no, E = self.num_outputs, self.num_expert
        pol_w = E * no
        actions = [out[:, i * no:(i + 1) * no] for i in range(E)]
        v = out[:, pol_w:pol_w + 1]
        w = out[:, pol_w + 1:pol_w + 1 + E]
        return actions, v, w


# ------------------------------ pure-JAX reference ---------------------------
def _mlp3_ref(x, params, final_act):
    w0, b0, w1, b1, w2, b2 = params
    h = jnp.maximum(x @ w0 + b0, 0.0)
    h = jnp.maximum(h @ w1 + b1, 0.0)
    z = h @ w2 + b2
    if final_act == "tanh":
        return jnp.tanh(z)
    if final_act == "softmax":
        return jax.nn.softmax(z, axis=-1)
    return z


if __name__ == "__main__":
    # Small, module-consistent shapes.
    batch = 8
    num_inputs = 32
    num_outputs = 8
    num_expert = 2

    key = jax.random.PRNGKey(0)
    k_param, k_x = jax.random.split(key)
    net = ActorCriticNetMixtureExpertPallas(
        k_param, num_inputs, num_outputs,
        hidden_layer=(64, 64), v_hidden_layer=(256, 256),
        w_hidden_layer=(256, 256), num_expert=num_expert)

    x = jax.random.normal(k_x, (batch, num_inputs), jnp.float32)

    actions, v, w = net.forward(x)
    actions = [jax.block_until_ready(a) for a in actions]
    v = jax.block_until_ready(v)
    w = jax.block_until_ready(w)

    # Shape checks (match PyTorch forward semantics).
    assert len(actions) == num_expert
    assert all(a.shape == (batch, num_outputs) for a in actions)
    assert v.shape == (batch, 1)
    assert w.shape == (batch, num_expert)

    # Numerical sanity vs. plain-JAX f32 reference (kernel matmuls use bf16
    # weights with f32 accumulation, hence the slightly looser tolerance).
    for a, p in zip(actions, net.expert_params):
        assert jnp.allclose(a, _mlp3_ref(x, p, "tanh"), atol=2e-2, rtol=2e-2)
    assert jnp.allclose(v, _mlp3_ref(x, net.v_params, "none"), atol=2e-2, rtol=2e-2)
    assert jnp.allclose(w, _mlp3_ref(x, net.w_params, "softmax"), atol=2e-2, rtol=2e-2)
    # Exact softmax normalization (review correctness concern addressed).
    assert jnp.allclose(jnp.sum(w, axis=-1), 1.0, atol=1e-5)

    print("KERNEL_OK")
</pallas_src>

<mosaic_0001>
module attributes {stable_mosaic.version = 11 : i64} {
  func.func @_fused_kernel(%arg0: i32, %arg1: memref<8x32xf32, #tpu.memory_space<vmem>>, %arg2: memref<32x128xbf16, #tpu.memory_space<vmem>>, %arg3: memref<1x128xf32, #tpu.memory_space<vmem>>, %arg4: memref<128x128xbf16, #tpu.memory_space<vmem>>, %arg5: memref<1x128xf32, #tpu.memory_space<vmem>>, %arg6: memref<128x128xbf16, #tpu.memory_space<vmem>>, %arg7: memref<32x512xbf16, #tpu.memory_space<vmem>>, %arg8: memref<1x512xf32, #tpu.memory_space<vmem>>, %arg9: memref<512x512xbf16, #tpu.memory_space<vmem>>, %arg10: memref<1x512xf32, #tpu.memory_space<vmem>>, %arg11: memref<512x128xbf16, #tpu.memory_space<vmem>>, %arg12: memref<1x128xf32, #tpu.memory_space<vmem>>, %arg13: memref<8x128xf32, #tpu.memory_space<vmem>>) attributes {dimension_semantics = [#tpu.dimension_semantics<parallel>], iteration_bounds = array<i64: 1>, scalar_prefetch = 0 : i64, scratch_operands = 0 : i64, tpu.core_type = #tpu.core_type<tc>, window_params = [{transform_indices = @transform_0, window_bounds = array<i64: 8, 32>}, {pipeline_mode = #tpu.pipeline_mode<synchronous>, transform_indices = @transform_1, window_bounds = array<i64: 32, 128>}, {pipeline_mode = #tpu.pipeline_mode<synchronous>, transform_indices = @transform_2, window_bounds = array<i64: 1, 128>}, {pipeline_mode = #tpu.pipeline_mode<synchronous>, transform_indices = @transform_3, window_bounds = array<i64: 128, 128>}, {pipeline_mode = #tpu.pipeline_mode<synchronous>, transform_indices = @transform_4, window_bounds = array<i64: 1, 128>}, {pipeline_mode = #tpu.pipeline_mode<synchronous>, transform_indices = @transform_5, window_bounds = array<i64: 128, 128>}, {pipeline_mode = #tpu.pipeline_mode<synchronous>, transform_indices = @transform_6, window_bounds = array<i64: 32, 512>}, {pipeline_mode = #tpu.pipeline_mode<synchronous>, transform_indices = @transform_7, window_bounds = array<i64: 1, 512>}, {pipeline_mode = #tpu.pipeline_mode<synchronous>, transform_indices = @transform_8, window_bounds = array<i64: 512, 512>}, {pipeline_mode = #tpu.pipeline_mode<synchronous>, transform_indices = @transform_9, window_bounds = array<i64: 1, 512>}, {pipeline_mode = #tpu.pipeline_mode<synchronous>, transform_indices = @transform_10, window_bounds = array<i64: 512, 128>}, {pipeline_mode = #tpu.pipeline_mode<synchronous>, transform_indices = @transform_11, window_bounds = array<i64: 1, 128>}, {transform_indices = @transform_12, window_bounds = array<i64: 8, 128>}]} {
    %c0 = arith.constant 0 : index
    %c0_0 = arith.constant 0 : index
    %0 = vector.load %arg1[%c0, %c0_0] : memref<8x32xf32, #tpu.memory_space<vmem>>, vector<8x32xf32>
    %1 = arith.truncf %0 : vector<8x32xf32> to vector<8x32xbf16>
    %c0_1 = arith.constant 0 : index
    %c0_2 = arith.constant 0 : index
    %2 = vector.load %arg2[%c0_1, %c0_2] : memref<32x128xbf16, #tpu.memory_space<vmem>>, vector<32x128xbf16>
    %cst = arith.constant dense<0.000000e+00> : vector<8x128xf32>
    %3 = tpu.matmul %1, %2, %cst {dimension_numbers = #tpu.dot_dimension_numbers<[1], [0], [0], [1], [0, 0, 1, 1], [], []>} : vector<8x32xbf16>, vector<32x128xbf16>, vector<8x128xf32> -> vector<8x128xf32>
    %c0_3 = arith.constant 0 : index
    %c0_4 = arith.constant 0 : index
    %4 = vector.load %arg3[%c0_3, %c0_4] : memref<1x128xf32, #tpu.memory_space<vmem>>, vector<1x128xf32>
    %5 = vector.broadcast %4 : vector<1x128xf32> to vector<8x128xf32>
    %6 = arith.addf %3, %5 : vector<8x128xf32>
    %cst_5 = arith.constant 0.000000e+00 : f32
    %7 = vector.broadcast %cst_5 : f32 to vector<8x128xf32>
    %8 = arith.maximumf %6, %7 : vector<8x128xf32>
    %9 = arith.truncf %8 : vector<8x128xf32> to vector<8x128xbf16>
    %c0_6 = arith.constant 0 : index
    %c0_7 = arith.constant 0 : index
    %10 = vector.load %arg4[%c0_6, %c0_7] : memref<128x128xbf16, #tpu.memory_space<vmem>>, vector<128x128xbf16>
    %cst_8 = arith.constant dense<0.000000e+00> : vector<8x128xf32>
    %11 = tpu.matmul %9, %10, %cst_8 {dimension_numbers = #tpu.dot_dimension_numbers<[1], [0], [0], [1], [0, 0, 1, 1], [], []>} : vector<8x128xbf16>, vector<128x128xbf16>, vector<8x128xf32> -> vector<8x128xf32>
    %c0_9 = arith.constant 0 : index
    %c0_10 = arith.constant 0 : index
    %12 = vector.load %arg5[%c0_9, %c0_10] : memref<1x128xf32, #tpu.memory_space<vmem>>, vector<1x128xf32>
    %13 = vector.broadcast %12 : vector<1x128xf32> to vector<8x128xf32>
    %14 = arith.addf %11, %13 : vector<8x128xf32>
    %cst_11 = arith.constant 0.000000e+00 : f32
    %15 = vector.broadcast %cst_11 : f32 to vector<8x128xf32>
    %16 = arith.maximumf %14, %15 : vector<8x128xf32>
    %17 = arith.truncf %16 : vector<8x128xf32> to vector<8x128xbf16>
    %c0_12 = arith.constant 0 : index
    %c0_13 = arith.constant 0 : index
    %18 = vector.load %arg7[%c0_12, %c0_13] : memref<32x512xbf16, #tpu.memory_space<vmem>>, vector<32x512xbf16>
    %cst_14 = arith.constant dense<0.000000e+00> : vector<8x512xf32>
    %19 = tpu.matmul %1, %18, %cst_14 {dimension_numbers = #tpu.dot_dimension_numbers<[1], [0], [0], [1], [0, 0, 1, 1], [], []>} : vector<8x32xbf16>, vector<32x512xbf16>, vector<8x512xf32> -> vector<8x512xf32>
    %c0_15 = arith.constant 0 : index
    %c0_16 = arith.constant 0 : index
    %20 = vector.load %arg8[%c0_15, %c0_16] : memref<1x512xf32, #tpu.memory_space<vmem>>, vector<1x512xf32>
    %21 = vector.broadcast %20 : vector<1x512xf32> to vector<8x512xf32>
    %22 = arith.addf %19, %21 : vector<8x512xf32>
    %cst_17 = arith.constant 0.000000e+00 : f32
    %23 = vector.broadcast %cst_17 : f32 to vector<8x512xf32>
    %24 = arith.maximumf %22, %23 : vector<8x512xf32>
    %25 = arith.truncf %24 : vector<8x512xf32> to vector<8x512xbf16>
    %c0_18 = arith.constant 0 : index
    %c0_19 = arith.constant 0 : index
    %26 = vector.load %arg9[%c0_18, %c0_19] : memref<512x512xbf16, #tpu.memory_space<vmem>>, vector<512x512xbf16>
    %cst_20 = arith.constant dense<0.000000e+00> : vector<8x512xf32>
    %27 = tpu.matmul %25, %26, %cst_20 {dimension_numbers = #tpu.dot_dimension_numbers<[1], [0], [0], [1], [0, 0, 1, 1], [], []>} : vector<8x512xbf16>, vector<512x512xbf16>, vector<8x512xf32> -> vector<8x512xf32>
    %c0_21 = arith.constant 0 : index
    %c0_22 = arith.constant 0 : index
    %28 = vector.load %arg10[%c0_21, %c0_22] : memref<1x512xf32, #tpu.memory_space<vmem>>, vector<1x512xf32>
    %29 = vector.broadcast %28 : vector<1x512xf32> to vector<8x512xf32>
    %30 = arith.addf %27, %29 : vector<8x512xf32>
    %cst_23 = arith.constant 0.000000e+00 : f32
    %31 = vector.broadcast %cst_23 : f32 to vector<8x512xf32>
    %32 = arith.maximumf %30, %31 : vector<8x512xf32>
    %33 = arith.truncf %32 : vector<8x512xf32> to vector<8x512xbf16>
    %c0_24 = arith.constant 0 : index
    %c0_25 = arith.constant 0 : index
    %34 = vector.load %arg6[%c0_24, %c0_25] : memref<128x128xbf16, #tpu.memory_space<vmem>>, vector<128x128xbf16>
    %cst_26 = arith.constant dense<0.000000e+00> : vector<8x128xf32>
    %35 = tpu.matmul %17, %34, %cst_26 {dimension_numbers = #tpu.dot_dimension_numbers<[1], [0], [0], [1], [0, 0, 1, 1], [], []>} : vector<8x128xbf16>, vector<128x128xbf16>, vector<8x128xf32> -> vector<8x128xf32>
    %c0_27 = arith.constant 0 : index
    %c0_28 = arith.constant 0 : index
    %36 = vector.load %arg11[%c0_27, %c0_28] : memref<512x128xbf16, #tpu.memory_space<vmem>>, vector<512x128xbf16>
    %cst_29 = arith.constant dense<0.000000e+00> : vector<8x128xf32>
    %37 = tpu.matmul %33, %36, %cst_29 {dimension_numbers = #tpu.dot_dimension_numbers<[1], [0], [0], [1], [0, 0, 1, 1], [], []>} : vector<8x512xbf16>, vector<512x128xbf16>, vector<8x128xf32> -> vector<8x128xf32>
    %38 = arith.addf %35, %37 : vector<8x128xf32>
    %c0_30 = arith.constant 0 : index
    %c0_31 = arith.constant 0 : index
    %39 = vector.load %arg12[%c0_30, %c0_31] : memref<1x128xf32, #tpu.memory_space<vmem>>, vector<1x128xf32>
    %40 = vector.broadcast %39 : vector<1x128xf32> to vector<8x128xf32>
    %41 = arith.addf %38, %40 : vector<8x128xf32>
    %42 = tpu.iota {dimensions = array<i32: 1>} : vector<8x128xi32>
    %c17_i32 = arith.constant 17 : i32
    %43 = vector.broadcast %c17_i32 : i32 to vector<8x128xi32>
    %44 = arith.cmpi sge, %42, %43 : vector<8x128xi32>
    %c19_i32 = arith.constant 19 : i32
    %45 = vector.broadcast %c19_i32 : i32 to vector<8x128xi32>
    %46 = arith.cmpi slt, %42, %45 : vector<8x128xi32>
    %47 = arith.andi %44, %46 : vector<8x128xi1>
    %cst_32 = arith.constant -1.000000e+30 : f32
    %48 = vector.broadcast %cst_32 : f32 to vector<8x128xf32>
    %49 = arith.select %47, %41, %48 : vector<8x128xi1>, vector<8x128xf32>
    %cst_33 = arith.constant dense<0xFF800000> : vector<8xf32>
    %50 = vector.multi_reduction <maximumf>, %49, %cst_33 [1] : vector<8x128xf32> to vector<8xf32>
    %51 = vector.shape_cast %50 : vector<8xf32> to vector<8x1xf32>
    %52 = vector.broadcast %51 : vector<8x1xf32> to vector<8x128xf32>
    %53 = arith.subf %49, %52 : vector<8x128xf32>
    %54 = math.exp %53 : vector<8x128xf32>
    %cst_34 = arith.constant 0.000000e+00 : f32
    %55 = vector.broadcast %cst_34 : f32 to vector<8x128xf32>
    %56 = arith.select %47, %54, %55 : vector<8x128xi1>, vector<8x128xf32>
    %cst_35 = arith.constant dense<0.000000e+00> : vector<8xf32>
    %57 = vector.multi_reduction <add>, %56, %cst_35 [1] : vector<8x128xf32> to vector<8xf32>
    %58 = vector.shape_cast %57 : vector<8xf32> to vector<8x1xf32>
    %59 = vector.broadcast %58 : vector<8x1xf32> to vector<8x128xf32>
    %60 = arith.divf %56, %59 : vector<8x128xf32>
    %c16_i32 = arith.constant 16 : i32
    %61 = vector.broadcast %c16_i32 : i32 to vector<8x128xi32>
    %62 = arith.cmpi slt, %42, %61 : vector<8x128xi32>
    %63 = math.tanh %41 : vector<8x128xf32>
    %c16_i32_36 = arith.constant 16 : i32
    %64 = vector.broadcast %c16_i32_36 : i32 to vector<8x128xi32>
    %65 = arith.cmpi eq, %42, %64 : vector<8x128xi32>
    %66 = arith.select %65, %41, %60 : vector<8x128xi1>, vector<8x128xf32>
    %67 = arith.select %62, %63, %66 : vector<8x128xi1>, vector<8x128xf32>
    %c0_37 = arith.constant 0 : index
    %c0_38 = arith.constant 0 : index
    %68 = vector.load %arg13[%c0_37, %c0_38] : memref<8x128xf32, #tpu.memory_space<vmem>>, vector<8x128xf32>
    tpu.vector_store %arg13[%c0_37, %c0_38], %67 {strides = array<i32>} : memref<8x128xf32, #tpu.memory_space<vmem>>, vector<8x128xf32>,
    return
  }
  func.func @transform_0(%arg0: i32) -> (i32, i32) {
    %c0_i32 = arith.constant 0 : i32
    %c0_i32_0 = arith.constant 0 : i32
    return %arg0, %c0_i32 : i32, i32
  }
  func.func @transform_1(%arg0: i32) -> (i32, i32) {
    %c0_i32 = arith.constant 0 : i32
    %c0_i32_0 = arith.constant 0 : i32
    %c0_i32_1 = arith.constant 0 : i32
    return %c0_i32, %c0_i32_0 : i32, i32
  }
  func.func @transform_2(%arg0: i32) -> (i32, i32) {
    %c0_i32 = arith.constant 0 : i32
    %c0_i32_0 = arith.constant 0 : i32
    %c0_i32_1 = arith.constant 0 : i32
    return %c0_i32, %c0_i32_0 : i32, i32
  }
  func.func @transform_3(%arg0: i32) -> (i32, i32) {
    %c0_i32 = arith.constant 0 : i32
    %c0_i32_0 = arith.constant 0 : i32
    %c0_i32_1 = arith.constant 0 : i32
    return %c0_i32, %c0_i32_0 : i32, i32
  }
  func.func @transform_4(%arg0: i32) -> (i32, i32) {
    %c0_i32 = arith.constant 0 : i32
    %c0_i32_0 = arith.constant 0 : i32
    %c0_i32_1 = arith.constant 0 : i32
    return %c0_i32, %c0_i32_0 : i32, i32
  }
  func.func @transform_5(%arg0: i32) -> (i32, i32) {
    %c0_i32 = arith.constant 0 : i32
    %c0_i32_0 = arith.constant 0 : i32
    %c0_i32_1 = arith.constant 0 : i32
    return %c0_i32, %c0_i32_0 : i32, i32
  }
  func.func @transform_6(%arg0: i32) -> (i32, i32) {
    %c0_i32 = arith.constant 0 : i32
    %c0_i32_0 = arith.constant 0 : i32
    %c0_i32_1 = arith.constant 0 : i32
    return %c0_i32, %c0_i32_0 : i32, i32
  }
  func.func @transform_7(%arg0: i32) -> (i32, i32) {
    %c0_i32 = arith.constant 0 : i32
    %c0_i32_0 = arith.constant 0 : i32
    %c0_i32_1 = arith.constant 0 : i32
    return %c0_i32, %c0_i32_0 : i32, i32
  }
  func.func @transform_8(%arg0: i32) -> (i32, i32) {
    %c0_i32 = arith.constant 0 : i32
    %c0_i32_0 = arith.constant 0 : i32
    %c0_i32_1 = arith.constant 0 : i32
    return %c0_i32, %c0_i32_0 : i32, i32
  }
  func.func @transform_9(%arg0: i32) -> (i32, i32) {
    %c0_i32 = arith.constant 0 : i32
    %c0_i32_0 = arith.constant 0 : i32
    %c0_i32_1 = arith.constant 0 : i32
    return %c0_i32, %c0_i32_0 : i32, i32
  }
  func.func @transform_10(%arg0: i32) -> (i32, i32) {
    %c0_i32 = arith.constant 0 : i32
    %c0_i32_0 = arith.constant 0 : i32
    %c0_i32_1 = arith.constant 0 : i32
    return %c0_i32, %c0_i32_0 : i32, i32
  }
  func.func @transform_11(%arg0: i32) -> (i32, i32) {
    %c0_i32 = arith.constant 0 : i32
    %c0_i32_0 = arith.constant 0 : i32
    %c0_i32_1 = arith.constant 0 : i32
    return %c0_i32, %c0_i32_0 : i32, i32
  }
  func.func @transform_12(%arg0: i32) -> (i32, i32) {
    %c0_i32 = arith.constant 0 : i32
    %c0_i32_0 = arith.constant 0 : i32
    return %arg0, %c0_i32 : i32, i32
  }
}

</mosaic_0001>

<llo_original>
// kernel: tpu_custom_call.1
$region0: #{tpu_custom_call.1}
  #allocation0 [shape = 'u32[]', space=smem, size = 0x4, offset = 0x4, fixed_abs, tag = 'smem constant byte address 0x4 - core index']
  #allocation1 [shape = 'u32[144,128]{1,0:T(1,128)}', space=vmem, size = 0x12000, scoped, tag = 'internal scratch']
  %s0 = inlined_call_operand.hbm [shape: f32[8,32], index: 0, kind: input, shape index: {}]
  %s1 = inlined_call_operand.hbm [shape: bf16[32,128], index: 1, kind: input, shape index: {}]
  %s2 = inlined_call_operand.vmem [shape: f32[1,128], index: 2, kind: input, shape index: {}]
  %s3 = inlined_call_operand.hbm [shape: bf16[128,128], index: 3, kind: input, shape index: {}]
  %s4 = inlined_call_operand.vmem [shape: f32[1,128], index: 4, kind: input, shape index: {}]
  %s5 = inlined_call_operand.hbm [shape: bf16[128,128], index: 5, kind: input, shape index: {}]
  %s6 = inlined_call_operand.hbm [shape: bf16[32,512], index: 6, kind: input, shape index: {}]
  %s7 = inlined_call_operand.vmem [shape: f32[1,512], index: 7, kind: input, shape index: {}]
  %s8 = inlined_call_operand.hbm [shape: bf16[512,512], index: 8, kind: input, shape index: {}]
  %s9 = inlined_call_operand.vmem [shape: f32[1,512], index: 9, kind: input, shape index: {}]
  %s10 = inlined_call_operand.hbm [shape: bf16[512,128], index: 10, kind: input, shape index: {}]
  %s11 = inlined_call_operand.vmem [shape: f32[1,128], index: 11, kind: input, shape index: {}]
  %s12 = inlined_call_operand.hbm [shape: f32[8,128], index: 12, kind: output, shape index: {}]
  %s13 = sld [smem:[#allocation0]]
  $region86: #{tpu_custom_call.1} parent=0
    _
  %s15 = ssub.s32 1, %s13
  %s16 = scalar_select 0, %s15, %s13
  $region1: #{tpu_custom_call.1} parent=0
    #allocation2 [shape = 'u8[4096]{0}', space=vmem, size = 0x1000, scoped, tag = 'input window, operand 0, single buffered']
    #allocation3 [shape = 's32[1]{0}', space=sflag, size = 0x4, scoped, tag = 'scoped memory for tpu_custom_call.1']
    #allocation4 [shape = 's32[1]{0}', space=sflag, size = 0x4, scoped, tag = 'scoped memory for tpu_custom_call.1']
    #allocation5 [shape = 'u8[8192]{0}', space=vmem, size = 0x2000, scoped, tag = 'input window, operand 1, single buffered']
    #allocation6 [shape = 's32[1]{0}', space=sflag, size = 0x4, scoped, tag = 'scoped memory for tpu_custom_call.1']
    #allocation7 [shape = 'u8[32768]{0}', space=vmem, size = 0x8000, scoped, tag = 'input window, operand 3, single buffered']
    #allocation8 [shape = 'u8[32768]{0}', space=vmem, size = 0x8000, scoped, tag = 'input window, operand 5, single buffered']
    #allocation9 [shape = 's32[1]{0}', space=sflag, size = 0x4, scoped, tag = 'scoped memory for tpu_custom_call.1']
    #allocation10 [shape = 'u8[32768]{0}', space=vmem, size = 0x8000, scoped, tag = 'input window, operand 6, single buffered']
    #allocation11 [shape = 'u8[524288]{0}', space=vmem, size = 0x80000, scoped, tag = 'input window, operand 8, single buffered']
    #allocation12 [shape = 's32[1]{0}', space=sflag, size = 0x4, scoped, tag = 'scoped memory for tpu_custom_call.1']
    #allocation13 [shape = 'u8[131072]{0}', space=vmem, size = 0x20000, scoped, tag = 'input window, operand 10, single buffered']
    #allocation14 [shape = 'u8[4096]{0}', space=vmem, size = 0x1000, scoped, tag = 'output window, operand 0, single buffered']
    %17 = vsyncpa [#allocation3], 0
    %18 = vsyncpa [#allocation6], 0
    %19 = vsyncpa [#allocation9], 0
    %20 = vsyncpa [#allocation12], 0
    %21 = vsyncpa [#allocation4], 0
    // Predicated region
    $region2: #{tpu_custom_call.1} parent=1 // pred_check
      _
    $region3: #{tpu_custom_call.1} parent=1 // pred_check_branch
      %23 = sbr.rel (0) target = $region5
    $region4: #{tpu_custom_call.1} parent=1 // pred_region
      %s25 = ssub.s32 128, 128
      %26 = vsyncadd [#allocation3], %s25
      %s28 = sshll.u32 [#allocation2], 4
      %s29 = int_to_ptr.vmem [resolvable:$true] %s28
      %31 = dma.hbm_to_vmem [thread:$0]  %s0, 128, %s29, [#allocation3]
    $region5: #{tpu_custom_call.1} parent=1 // pred_fallthru
      _
    // Predicated region
    $region6: #{tpu_custom_call.1} parent=1 // pred_check
      _
    $region7: #{tpu_custom_call.1} parent=1 // pred_check_branch
      %33 = sbr.rel (0) target = $region9
    $region8: #{tpu_custom_call.1} parent=1 // pred_region
      %s35 = ssub.s32 256, 256
      %36 = vsyncadd [#allocation6], %s35
      %s37 = sshll.u32 [#allocation5], 4
      %s38 = int_to_ptr.vmem [resolvable:$true] %s37
      %43 = dma.hbm_to_vmem [thread:$0]  %s1, 256, %s38, [#allocation6], 64, 64, 4
    $region9: #{tpu_custom_call.1} parent=1 // pred_fallthru
      _
    // Predicated region
    $region10: #{tpu_custom_call.1} parent=1 // pred_check
      _
    $region11: #{tpu_custom_call.1} parent=1 // pred_check_branch
      %45 = sbr.rel (0) target = $region13
    $region12: #{tpu_custom_call.1} parent=1 // pred_region
      _
    $region13: #{tpu_custom_call.1} parent=1 // pred_fallthru
      _
    // Predicated region
    $region14: #{tpu_custom_call.1} parent=1 // pred_check
      _
    $region15: #{tpu_custom_call.1} parent=1 // pred_check_branch
      %47 = sbr.rel (0) target = $region17
    $region16: #{tpu_custom_call.1} parent=1 // pred_region
      %s49 = ssub.s32 1024, 1024
      %50 = vsyncadd [#allocation6], %s49
      %s51 = sshll.u32 [#allocation7], 4
      %s52 = int_to_ptr.vmem [resolvable:$true] %s51
      %57 = dma.hbm_to_vmem [thread:$0]  %s3, 1024, %s52, [#allocation6], 64, 64, 4
    $region17: #{tpu_custom_call.1} parent=1 // pred_fallthru
      _
    // Predicated region
    $region18: #{tpu_custom_call.1} parent=1 // pred_check
      _
    $region19: #{tpu_custom_call.1} parent=1 // pred_check_branch
      %59 = sbr.rel (0) target = $region21
    $region20: #{tpu_custom_call.1} parent=1 // pred_region
      _
    $region21: #{tpu_custom_call.1} parent=1 // pred_fallthru
      _
    // Predicated region
    $region22: #{tpu_custom_call.1} parent=1 // pred_check
      _
    $region23: #{tpu_custom_call.1} parent=1 // pred_check_branch
      %61 = sbr.rel (0) target = $region25
    $region24: #{tpu_custom_call.1} parent=1 // pred_region
      %s63 = ssub.s32 1024, 1024
      %64 = vsyncadd [#allocation9], %s63
      %s65 = sshll.u32 [#allocation8], 4
      %s66 = int_to_ptr.vmem [resolvable:$true] %s65
      %71 = dma.hbm_to_vmem [thread:$0]  %s5, 1024, %s66, [#allocation9], 64, 64, 4
    $region25: #{tpu_custom_call.1} parent=1 // pred_fallthru
      _
    // Predicated region
    $region26: #{tpu_custom_call.1} parent=1 // pred_check
      _
    $region27: #{tpu_custom_call.1} parent=1 // pred_check_branch
      %73 = sbr.rel (0) target = $region29
    $region28: #{tpu_custom_call.1} parent=1 // pred_region
      %s75 = ssub.s32 1024, 1024
      %76 = vsyncadd [#allocation9], %s75
      %s77 = sshll.u32 [#allocation10], 4
      %s78 = int_to_ptr.vmem [resolvable:$true] %s77
      %83 = dma.hbm_to_vmem [thread:$0]  %s6, 1024, %s78, [#allocation9], 256, 256, 16
    $region29: #{tpu_custom_call.1} parent=1 // pred_fallthru
      _
    // Predicated region
    $region30: #{tpu_custom_call.1} parent=1 // pred_check
      _
    $region31: #{tpu_custom_call.1} parent=1 // pred_check_branch
      %85 = sbr.rel (0) target = $region33
    $region32: #{tpu_custom_call.1} parent=1 // pred_region
      _
    $region33: #{tpu_custom_call.1} parent=1 // pred_fallthru
      _
    // Predicated region
    $region34: #{tpu_custom_call.1} parent=1 // pred_check
      _
    $region35: #{tpu_custom_call.1} parent=1 // pred_check_branch
      %87 = sbr.rel (0) target = $region37
    $region36: #{tpu_custom_call.1} parent=1 // pred_region
      %s89 = ssub.s32 16384, 16384
      %90 = vsyncadd [#allocation12], %s89
      %s91 = sshll.u32 [#allocation11], 4
      %s92 = int_to_ptr.vmem [resolvable:$true] %s91
      %97 = dma.hbm_to_vmem [thread:$0]  %s8, 16384, %s92, [#allocation12], 256, 256, 16
    $region37: #{tpu_custom_call.1} parent=1 // pred_fallthru
      _
    // Predicated region
    $region38: #{tpu_custom_call.1} parent=1 // pred_check
      _
    $region39: #{tpu_custom_call.1} parent=1 // pred_check_branch
      %99 = sbr.rel (0) target = $region41
    $region40: #{tpu_custom_call.1} parent=1 // pred_region
      _
    $region41: #{tpu_custom_call.1} parent=1 // pred_fallthru
      _
    // Predicated region
    $region42: #{tpu_custom_call.1} parent=1 // pred_check
      _
    $region43: #{tpu_custom_call.1} parent=1 // pred_check_branch
      %101 = sbr.rel (0) target = $region45
    $region44: #{tpu_custom_call.1} parent=1 // pred_region
      %s103 = ssub.s32 4096, 4096
      %104 = vsyncadd [#allocation12], %s103
      %s105 = sshll.u32 [#allocation13], 4
      %s106 = int_to_ptr.vmem [resolvable:$true] %s105
      %111 = dma.hbm_to_vmem [thread:$0]  %s10, 4096, %s106, [#allocation12], 64, 64, 4
    $region45: #{tpu_custom_call.1} parent=1 // pred_fallthru
      _
    // Predicated region
    $region46: #{tpu_custom_call.1} parent=1 // pred_check
      _
    $region47: #{tpu_custom_call.1} parent=1 // pred_check_branch
      %113 = sbr.rel (0) target = $region49
    $region48: #{tpu_custom_call.1} parent=1 // pred_region
      _
    $region49: #{tpu_custom_call.1} parent=1 // pred_fallthru
      _
    // Predicated region
    $region50: #{tpu_custom_call.1} parent=1 // pred_check
      _
    $region51: #{tpu_custom_call.1} parent=1 // pred_check_branch
      %115 = sbr.rel (0) target = $region53
    $region52: #{tpu_custom_call.1} parent=1 // pred_region
      %116 = dma.done [#allocation3], 128
    $region53: #{tpu_custom_call.1} parent=1 // pred_fallthru
      _
    // Predicated region
    $region54: #{tpu_custom_call.1} parent=1 // pred_check
      _
    $region55: #{tpu_custom_call.1} parent=1 // pred_check_branch
      %118 = sbr.rel (0) target = $region57
    $region56: #{tpu_custom_call.1} parent=1 // pred_region
      %119 = dma.done [#allocation6], 256
    $region57: #{tpu_custom_call.1} parent=1 // pred_fallthru
      _
    // Predicated region
    $region58: #{tpu_custom_call.1} parent=1 // pred_check
      _
    $region59: #{tpu_custom_call.1} parent=1 // pred_check_branch
      %121 = sbr.rel (0) target = $region61
    $region60: #{tpu_custom_call.1} parent=1 // pred_region
      %122 = dma.done [#allocation6], 1024
    $region61: #{tpu_custom_call.1} parent=1 // pred_fallthru
      _
    // Predicated region
    $region62: #{tpu_custom_call.1} parent=1 // pred_check
      _
    $region63: #{tpu_custom_call.1} parent=1 // pred_check_branch
      %124 = sbr.rel (0) target = $region65
    $region64: #{tpu_custom_call.1} parent=1 // pred_region
      %125 = dma.done [#allocation9], 1024
    $region65: #{tpu_custom_call.1} parent=1 // pred_fallthru
      _
    // Predicated region
    $region66: #{tpu_custom_call.1} parent=1 // pred_check
      _
    $region67: #{tpu_custom_call.1} parent=1 // pred_check_branch
      %127 = sbr.rel (0) target = $region69
    $region68: #{tpu_custom_call.1} parent=1 // pred_region
      %128 = dma.done [#allocation9], 1024
    $region69: #{tpu_custom_call.1} parent=1 // pred_fallthru
      _
    // Predicated region
    $region70: #{tpu_custom_call.1} parent=1 // pred_check
      _
    $region71: #{tpu_custom_call.1} parent=1 // pred_check_branch
      %130 = sbr.rel (0) target = $region73
    $region72: #{tpu_custom_call.1} parent=1 // pred_region
      %131 = dma.done [#allocation12], 16384
    $region73: #{tpu_custom_call.1} parent=1 // pred_fallthru
      _
    // Predicated region
    $region74: #{tpu_custom_call.1} parent=1 // pred_check
      _
    $region75: #{tpu_custom_call.1} parent=1 // pred_check_branch
      %133 = sbr.rel (0) target = $region77
    $region76: #{tpu_custom_call.1} parent=1 // pred_region
      %134 = dma.done [#allocation12], 4096
    $region77: #{tpu_custom_call.1} parent=1 // pred_fallthru
      _
    %v136 = vld [vmem:[#allocation2] sm:$0xff]
    %v137 = vpack.c.bf16 %v136, %v136
    %v138 = vld [vmem:[#allocation5] sm:$0xf]
    %v139 = vld [vmem:[#allocation5 + $0x4] sm:$0xf]
    %v140 = vld [vmem:[#allocation5 + $0x8] sm:$0xf]
    %v141 = vld [vmem:[#allocation5 + $0xc] sm:$0xf]
    %v142 = vld [vmem:[%s2] sm:$0x1]
    %v144 = vlaneseq
    %v145 = vshrl.u32 %v144, 7
    %v146 = vsub.s32 0, %v145
    %v147 = vrot.slane %v142, %v146
    %v153 = vunpack.c.l.b16 %v138
    %v154 = vunpack.c.l.b16 %v139
    %v155 = vunpack.c.l.b16 %v140
    %v156 = vunpack.c.l.b16 %v141
    %v157 = vpack.c.b16 %v154, %v153
    %v158 = vpack.c.b16 %v156, %v155
    %vm161 = vcmask 261120
    %v163 = vsel %vm161, %v137, 0
    %165 = vmatprep.subr.bf16.mxu0 0
    %166 = vmatpush1.bf16.msra.mxu0 %v157
    %167 = vmatprep.subr.bf16.mxu0 0
    %168 = vmatpush1.bf16.msra.mxu0 %v158
    %169 = vmatprep.subr.bf16.mxu0 0
    %170 = vmatpush1.bf16.msra.mxu0 0
    %171 = vmatprep.subr.bf16.mxu0 0
    %172 = vmatpush1.bf16.msra.mxu0 0
    %173 = vmatprep.subr.bf16.mxu0 0
    %174 = vmatpush1.bf16.msra.mxu0 0
    %175 = vmatprep.subr.bf16.mxu0 0
    %176 = vmatpush1.bf16.msra.mxu0 0
    %177 = vmatprep.subr.bf16.mxu0 0
    %178 = vmatpush1.bf16.msra.mxu0 0
    %179 = vmatprep.subr.bf16.mxu0 0
    %180 = vmatpush1.bf16.msra.mxu0 0
    %181 = vmatprep.subr.bf16.mxu0 0
    %182 = vmatpush1.bf16.msra.mxu0 0
    %183 = vmatprep.subr.bf16.mxu0 0
    %184 = vmatpush1.bf16.msra.mxu0 0
    %185 = vmatprep.subr.bf16.mxu0 0
    %186 = vmatpush1.bf16.msra.mxu0 0
    %187 = vmatprep.subr.bf16.mxu0 0
    %188 = vmatpush1.bf16.msra.mxu0 0
    %189 = vmatprep.subr.bf16.mxu0 0
    %190 = vmatpush1.bf16.msra.mxu0 0
    %191 = vmatprep.subr.bf16.mxu0 0
    %192 = vmatpush1.bf16.msra.mxu0 0
    %193 = vmatprep.subr.bf16.mxu0 0
    %194 = vmatpush1.bf16.msra.mxu0 0
    %195 = vmatprep.subr.bf16.mxu0 0
    %196 = vmatpush1.bf16.msra.mxu0 0
    %197 = vmatprep.mubr.bf16.mxu0 0
    %198 = vmatmul.mubr.bf16.gmra.mrb[0].mxu0 %v163
    %v199 = vpop.f32.mrb[0].mxu0
    %v200 = vadd.f32 %v147, %v199
    %v201 = vpop.f32.mrb[0].mxu0
    %v202 = vpop.f32.mrb[0].mxu0
    %v203 = vpop.f32.mrb[0].mxu0
    %204 = vdwg.mxu0
    %v205 = vmax.f32 %v200, 0.0
    %v206 = vpack.c.bf16 %v205, %v205
    %v207 = vld [vmem:[#allocation7] sm:$0xf]
    %v208 = vld [vmem:[#allocation7 + $0x4] sm:$0xf]
    %v209 = vld [vmem:[#allocation7 + $0x8] sm:$0xf]
    %v210 = vld [vmem:[#allocation7 + $0xc] sm:$0xf]
    %v211 = vld [vmem:[#allocation7 + $0x10] sm:$0xf]
    %v212 = vld [vmem:[#allocation7 + $0x14] sm:$0xf]
    %v213 = vld [vmem:[#allocation7 + $0x18] sm:$0xf]
    %v214 = vld [vmem:[#allocation7 + $0x1c] sm:$0xf]
    %v215 = vld [vmem:[#allocation7 + $0x20] sm:$0xf]
    %v216 = vld [vmem:[#allocation7 + $0x24] sm:$0xf]
    %v217 = vld [vmem:[#allocation7 + $0x28] sm:$0xf]
    %v218 = vld [vmem:[#allocation7 + $0x2c] sm:$0xf]
    %v219 = vld [vmem:[#allocation7 + $0x30] sm:$0xf]
    %v220 = vld [vmem:[#allocation7 + $0x34] sm:$0xf]
    %v221 = vld [vmem:[#allocation7 + $0x38] sm:$0xf]
    %v222 = vld [vmem:[#allocation7 + $0x3c] sm:$0xf]
    %v223 = vld [vmem:[%s4] sm:$0x1]
    %v225 = vlaneseq
    %v226 = vshrl.u32 %v225, 7
    %v227 = vsub.s32 0, %v226
    %v228 = vrot.slane %v223, %v227
    %v246 = vunpack.c.l.b16 %v207
    %v247 = vunpack.c.l.b16 %v208
    %v248 = vunpack.c.l.b16 %v209
    %v249 = vunpack.c.l.b16 %v210
    %v250 = vunpack.c.l.b16 %v211
    %v251 = vunpack.c.l.b16 %v212
    %v252 = vunpack.c.l.b16 %v213
    %v253 = vunpack.c.l.b16 %v214
    %v254 = vunpack.c.l.b16 %v215
    %v255 = vunpack.c.l.b16 %v216
    %v256 = vunpack.c.l.b16 %v217
    %v257 = vunpack.c.l.b16 %v218
    %v258 = vunpack.c.l.b16 %v219
    %v259 = vunpack.c.l.b16 %v220
    %v260 = vunpack.c.l.b16 %v221
    %v261 = vunpack.c.l.b16 %v222
    %v262 = vpack.c.b16 %v247, %v246
    %v263 = vpack.c.b16 %v249, %v248
    %v264 = vpack.c.b16 %v251, %v250
    %v265 = vpack.c.b16 %v253, %v252
    %v266 = vpack.c.b16 %v255, %v254
    %v267 = vpack.c.b16 %v257, %v256
    %v268 = vpack.c.b16 %v259, %v258
    %v269 = vpack.c.b16 %v261, %v260
    %278 = vmatprep.subr.bf16.mxu0 0
    %279 = vmatpush1.bf16.msra.mxu0 %v262
    %280 = vmatprep.subr.bf16.mxu0 0
    %281 = vmatpush1.bf16.msra.mxu0 %v263
    %282 = vmatprep.subr.bf16.mxu0 0
    %283 = vmatpush1.bf16.msra.mxu0 %v264
    %284 = vmatprep.subr.bf16.mxu0 0
    %285 = vmatpush1.bf16.msra.mxu0 %v265
    %286 = vmatprep.subr.bf16.mxu0 0
    %287 = vmatpush1.bf16.msra.mxu0 %v266
    %288 = vmatprep.subr.bf16.mxu0 0
    %289 = vmatpush1.bf16.msra.mxu0 %v267
    %290 = vmatprep.subr.bf16.mxu0 0
    %291 = vmatpush1.bf16.msra.mxu0 %v268
    %292 = vmatprep.subr.bf16.mxu0 0
    %293 = vmatpush1.bf16.msra.mxu0 %v269
    %294 = vmatprep.subr.bf16.mxu0 0
    %295 = vmatpush1.bf16.msra.mxu0 0
    %296 = vmatprep.subr.bf16.mxu0 0
    %297 = vmatpush1.bf16.msra.mxu0 0
    %298 = vmatprep.subr.bf16.mxu0 0
    %299 = vmatpush1.bf16.msra.mxu0 0
    %300 = vmatprep.subr.bf16.mxu0 0
    %301 = vmatpush1.bf16.msra.mxu0 0
    %302 = vmatprep.subr.bf16.mxu0 0
    %303 = vmatpush1.bf16.msra.mxu0 0
    %304 = vmatprep.subr.bf16.mxu0 0
    %305 = vmatpush1.bf16.msra.mxu0 0
    %306 = vmatprep.subr.bf16.mxu0 0
    %307 = vmatpush1.bf16.msra.mxu0 0
    %308 = vmatprep.subr.bf16.mxu0 0
    %309 = vmatpush1.bf16.msra.mxu0 0
    %310 = vmatprep.mubr.bf16.mxu0 0
    %311 = vmatmul.mubr.bf16.gmra.mrb[0].mxu0 %v206
    %v312 = vpop.f32.mrb[0].mxu0
    %v313 = vadd.f32 %v228, %v312
    %v314 = vpop.f32.mrb[0].mxu0
    %v315 = vpop.f32.mrb[0].mxu0
    %v316 = vpop.f32.mrb[0].mxu0
    %317 = vdwg.mxu0
    %v318 = vmax.f32 %v313, 0.0
    %v319 = vpack.c.bf16 %v318, %v318
    %v320 = vld [vmem:[#allocation10] sm:$0xff]
    %v321 = vld [vmem:[#allocation10 + $0x8] sm:$0xff]
    %v322 = vld [vmem:[#allocation10 + $0x10] sm:$0xff]
    %v323 = vld [vmem:[#allocation10 + $0x18] sm:$0xff]
    %v324 = vld [vmem:[#allocation10 + $0x20] sm:$0xff]
    %v325 = vld [vmem:[#allocation10 + $0x28] sm:$0xff]
    %v326 = vld [vmem:[#allocation10 + $0x30] sm:$0xff]
    %v327 = vld [vmem:[#allocation10 + $0x38] sm:$0xff]
    %v328 = vld [vmem:[%s7] sm:$0xf]
    %v330 = vlaneseq
    %v331 = vshrl.u32 %v330, 7
    %v332 = vsub.s32 0, %v331
    %v333 = vrot.slane %v328, %v332
    %v334 = vlaneseq
    %v335 = vshrl.u32 %v334, 7
    %v336 = vsub.s32 1, %v335
    %v337 = vrot.slane %v328, %v336
    %v338 = vlaneseq
    %v339 = vshrl.u32 %v338, 7
    %v340 = vsub.s32 2, %v339
    %v341 = vrot.slane %v328, %v340
    %v342 = vlaneseq
    %v343 = vshrl.u32 %v342, 7
    %v344 = vsub.s32 3, %v343
    %v345 = vrot.slane %v328, %v344
    %v358 = vunpack.c.l.b16 %v320
    %v359 = vunpack.c.h.b16 %v320
    %v360 = vunpack.c.l.b16 %v321
    %v361 = vunpack.c.h.b16 %v321
    %v362 = vunpack.c.l.b16 %v322
    %v363 = vunpack.c.h.b16 %v322
    %v364 = vunpack.c.l.b16 %v323
    %v365 = vunpack.c.h.b16 %v323
    %v366 = vunpack.c.l.b16 %v324
    %v367 = vunpack.c.h.b16 %v324
    %v368 = vunpack.c.l.b16 %v325
    %v369 = vunpack.c.h.b16 %v325
    %v370 = vunpack.c.l.b16 %v326
    %v371 = vunpack.c.h.b16 %v326
    %v372 = vunpack.c.l.b16 %v327
    %v373 = vunpack.c.h.b16 %v327
    %v374 = vpack.c.b16 %v362, %v358
    %v375 = vpack.c.b16 %v363, %v359
    %v376 = vpack.c.b16 %v364, %v360
    %v377 = vpack.c.b16 %v365, %v361
    %v378 = vpack.c.b16 %v370, %v366
    %v379 = vpack.c.b16 %v371, %v367
    %v380 = vpack.c.b16 %v372, %v368
    %v381 = vpack.c.b16 %v373, %v369
    %390 = vmatprep.subr.bf16.mxu0 %v375
    %391 = vmatpush1.bf16.msra.mxu0 %v374
    %392 = vmatprep.subr.bf16.mxu0 %v379
    %393 = vmatpush1.bf16.msra.mxu0 %v378
    %394 = vmatprep.subr.bf16.mxu0 0
    %395 = vmatpush1.bf16.msra.mxu0 0
    %396 = vmatprep.subr.bf16.mxu0 0
    %397 = vmatpush1.bf16.msra.mxu0 0
    %398 = vmatprep.subr.bf16.mxu0 0
    %399 = vmatpush1.bf16.msra.mxu0 0
    %400 = vmatprep.subr.bf16.mxu0 0
    %401 = vmatpush1.bf16.msra.mxu0 0
    %402 = vmatprep.subr.bf16.mxu0 0
    %403 = vmatpush1.bf16.msra.mxu0 0
    %404 = vmatprep.subr.bf16.mxu0 0
    %405 = vmatpush1.bf16.msra.mxu0 0
    %406 = vmatprep.subr.bf16.mxu0 0
    %407 = vmatpush1.bf16.msra.mxu0 0
    %408 = vmatprep.subr.bf16.mxu0 0
    %409 = vmatpush1.bf16.msra.mxu0 0
    %410 = vmatprep.subr.bf16.mxu0 0
    %411 = vmatpush1.bf16.msra.mxu0 0
    %412 = vmatprep.subr.bf16.mxu0 0
    %413 = vmatpush1.bf16.msra.mxu0 0
    %414 = vmatprep.subr.bf16.mxu0 0
    %415 = vmatpush1.bf16.msra.mxu0 0
    %416 = vmatprep.subr.bf16.mxu0 0
    %417 = vmatpush1.bf16.msra.mxu0 0
    %418 = vmatprep.subr.bf16.mxu0 0
    %419 = vmatpush1.bf16.msra.mxu0 0
    %420 = vmatprep.subr.bf16.mxu0 0
    %421 = vmatpush1.bf16.msra.mxu0 0
    %422 = vmatprep.mubr.bf16.mxu0 0
    %423 = vmatmul.mubr.bf16.gmra.mrb[0].mxu0 %v163
    %v424 = vpop.f32.mrb[0].mxu0
    %v425 = vadd.f32 %v333, %v424
    %v426 = vpop.f32.mrb[0].mxu0
    %v427 = vadd.f32 %v337, %v426
    %v428 = vpop.f32.mrb[0].mxu0
    %v429 = vpop.f32.mrb[0].mxu0
    %430 = vdwg.mxu0
    %431 = vmatprep.subr.bf16.mxu0 %v377
    %432 = vmatpush1.bf16.msra.mxu0 %v376
    %433 = vmatprep.subr.bf16.mxu0 %v381
    %434 = vmatpush1.bf16.msra.mxu0 %v380
    %435 = vmatprep.subr.bf16.mxu0 0
    %436 = vmatpush1.bf16.msra.mxu0 0
    %437 = vmatprep.subr.bf16.mxu0 0
    %438 = vmatpush1.bf16.msra.mxu0 0
    %439 = vmatprep.subr.bf16.mxu0 0
    %440 = vmatpush1.bf16.msra.mxu0 0
    %441 = vmatprep.subr.bf16.mxu0 0
    %442 = vmatpush1.bf16.msra.mxu0 0
    %443 = vmatprep.subr.bf16.mxu0 0
    %444 = vmatpush1.bf16.msra.mxu0 0
    %445 = vmatprep.subr.bf16.mxu0 0
    %446 = vmatpush1.bf16.msra.mxu0 0
    %447 = vmatprep.subr.bf16.mxu0 0
    %448 = vmatpush1.bf16.msra.mxu0 0
    %449 = vmatprep.subr.bf16.mxu0 0
    %450 = vmatpush1.bf16.msra.mxu0 0
    %451 = vmatprep.subr.bf16.mxu0 0
    %452 = vmatpush1.bf16.msra.mxu0 0
    %453 = vmatprep.subr.bf16.mxu0 0
    %454 = vmatpush1.bf16.msra.mxu0 0
    %455 = vmatprep.subr.bf16.mxu0 0
    %456 = vmatpush1.bf16.msra.mxu0 0
    %457 = vmatprep.subr.bf16.mxu0 0
    %458 = vmatpush1.bf16.msra.mxu0 0
    %459 = vmatprep.subr.bf16.mxu0 0
    %460 = vmatpush1.bf16.msra.mxu0 0
    %461 = vmatprep.subr.bf16.mxu0 0
    %462 = vmatpush1.bf16.msra.mxu0 0
    %463 = vmatprep.mubr.bf16.mxu0 0
    %464 = vmatmul.mubr.bf16.gmra.mrb[0].mxu0 %v163
    %v465 = vpop.f32.mrb[0].mxu0
    %v466 = vadd.f32 %v341, %v465
    %v467 = vpop.f32.mrb[0].mxu0
    %v468 = vadd.f32 %v345, %v467
    %v469 = vpop.f32.mrb[0].mxu0
    %v470 = vpop.f32.mrb[0].mxu0
    %471 = vdwg.mxu0
    %v472 = vmax.f32 %v425, 0.0
    %v473 = vmax.f32 %v427, 0.0
    %v474 = vmax.f32 %v466, 0.0
    %v475 = vmax.f32 %v468, 0.0
    %v476 = vpack.c.bf16 %v472, %v472
    %v477 = vpack.c.bf16 %v473, %v473
    %v478 = vpack.c.bf16 %v474, %v474
    %v479 = vpack.c.bf16 %v475, %v475
    %v480 = vld [vmem:[#allocation11] sm:$0xff]
    %v481 = vld [vmem:[#allocation11 + $0x8] sm:$0xff]
    %v482 = vld [vmem:[#allocation11 + $0x10] sm:$0xff]
    %v483 = vld [vmem:[#allocation11 + $0x18] sm:$0xff]
    %v484 = vld [vmem:[#allocation11 + $0x20] sm:$0xff]
    %v485 = vld [vmem:[#allocation11 + $0x28] sm:$0xff]
    %v486 = vld [vmem:[#allocation11 + $0x30] sm:$0xff]
    %v487 = vld [vmem:[#allocation11 + $0x38] sm:$0xff]
    %v488 = vld [vmem:[#allocation11 + $0x40] sm:$0xff]
    %v489 = vld [vmem:[#allocation11 + $0x48] sm:$0xff]
    %v490 = vld [vmem:[#allocation11 + $0x50] sm:$0xff]
    %v491 = vld [vmem:[#allocation11 + $0x58] sm:$0xff]
    %v492 = vld [vmem:[#allocation11 + $0x60] sm:$0xff]
    %v493 = vld [vmem:[#allocation11 + $0x68] sm:$0xff]
    %v494 = vld [vmem:[#allocation11 + $0x70] sm:$0xff]
    %v495 = vld [vmem:[#allocation11 + $0x78] sm:$0xff]
    %v496 = vld [vmem:[#allocation11 + $0x80] sm:$0xff]
    %v497 = vld [vmem:[#allocation11 + $0x88] sm:$0xff]
    %v498 = vld [vmem:[#allocation11 + $0x90] sm:$0xff]
    %v499 = vld [vmem:[#allocation11 + $0x98] sm:$0xff]
    %v500 = vld [vmem:[#allocation11 + $0xa0] sm:$0xff]
    %v501 = vld [vmem:[#allocation11 + $0xa8] sm:$0xff]
    %v502 = vld [vmem:[#allocation11 + $0xb0] sm:$0xff]
    %v503 = vld [vmem:[#allocation11 + $0xb8] sm:$0xff]
    %v504 = vld [vmem:[#allocation11 + $0xc0] sm:$0xff]
    %v505 = vld [vmem:[#allocation11 + $0xc8] sm:$0xff]
    %v506 = vld [vmem:[#allocation11 + $0xd0] sm:$0xff]
    %v507 = vld [vmem:[#allocation11 + $0xd8] sm:$0xff]
    %v508 = vld [vmem:[#allocation11 + $0xe0] sm:$0xff]
    %v509 = vld [vmem:[#allocation11 + $0xe8] sm:$0xff]
    %v510 = vld [vmem:[#allocation11 + $0xf0] sm:$0xff]
    %v511 = vld [vmem:[#allocation11 + $0xf8] sm:$0xff]
    %v512 = vld [vmem:[#allocation11 + $0x100] sm:$0xff]
    %v513 = vld [vmem:[#allocation11 + $0x108] sm:$0xff]
    %v514 = vld [vmem:[#allocation11 + $0x110] sm:$0xff]
    %v515 = vld [vmem:[#allocation11 + $0x118] sm:$0xff]
    %v516 = vld [vmem:[#allocation11 + $0x120] sm:$0xff]
    %v517 = vld [vmem:[#allocation11 + $0x128] sm:$0xff]
    %v518 = vld [vmem:[#allocation11 + $0x130] sm:$0xff]
    %v519 = vld [vmem:[#allocation11 + $0x138] sm:$0xff]
    %v520 = vld [vmem:[#allocation11 + $0x140] sm:$0xff]
    %v521 = vld [vmem:[#allocation11 + $0x148] sm:$0xff]
    %v522 = vld [vmem:[#allocation11 + $0x150] sm:$0xff]
    %v523 = vld [vmem:[#allocation11 + $0x158] sm:$0xff]
    %v524 = vld [vmem:[#allocation11 + $0x160] sm:$0xff]
    %v525 = vld [vmem:[#allocation11 + $0x168] sm:$0xff]
    %v526 = vld [vmem:[#allocation11 + $0x170] sm:$0xff]
    %v527 = vld [vmem:[#allocation11 + $0x178] sm:$0xff]
    %v528 = vld [vmem:[#allocation11 + $0x180] sm:$0xff]
    %v529 = vld [vmem:[#allocation11 + $0x188] sm:$0xff]
    %v530 = vld [vmem:[#allocation11 + $0x190] sm:$0xff]
    %v531 = vld [vmem:[#allocation11 + $0x198] sm:$0xff]
    %v532 = vld [vmem:[#allocation11 + $0x1a0] sm:$0xff]
    %v533 = vld [vmem:[#allocation11 + $0x1a8] sm:$0xff]
    %v534 = vld [vmem:[#allocation11 + $0x1b0] sm:$0xff]
    %v535 = vld [vmem:[#allocation11 + $0x1b8] sm:$0xff]
    %v536 = vld [vmem:[#allocation11 + $0x1c0] sm:$0xff]
    %v537 = vld [vmem:[#allocation11 + $0x1c8] sm:$0xff]
    %v538 = vld [vmem:[#allocation11 + $0x1d0] sm:$0xff]
    %v539 = vld [vmem:[#allocation11 + $0x1d8] sm:$0xff]
    %v540 = vld [vmem:[#allocation11 + $0x1e0] sm:$0xff]
    %v541 = vld [vmem:[#allocation11 + $0x1e8] sm:$0xff]
    %v542 = vld [vmem:[#allocation11 + $0x1f0] sm:$0xff]
    %v543 = vld [vmem:[#allocation11 + $0x1f8] sm:$0xff]
    %v544 = vld [vmem:[#allocation11 + $0x200] sm:$0xff]
    %v545 = vld [vmem:[#allocation11 + $0x208] sm:$0xff]
    %v546 = vld [vmem:[#allocation11 + $0x210] sm:$0xff]
    %v547 = vld [vmem:[#allocation11 + $0x218] sm:$0xff]
    %v548 = vld [vmem:[#allocation11 + $0x220] sm:$0xff]
    %v549 = vld [vmem:[#allocation11 + $0x228] sm:$0xff]
    %v550 = vld [vmem:[#allocation11 + $0x230] sm:$0xff]
    %v551 = vld [vmem:[#allocation11 + $0x238] sm:$0xff]
    %v552 = vld [vmem:[#allocation11 + $0x240] sm:$0xff]
    %v553 = vld [vmem:[#allocation11 + $0x248] sm:$0xff]
    %v554 = vld [vmem:[#allocation11 + $0x250] sm:$0xff]
    %v555 = vld [vmem:[#allocation11 + $0x258] sm:$0xff]
    %v556 = vld [vmem:[#allocation11 + $0x260] sm:$0xff]
    %v557 = vld [vmem:[#allocation11 + $0x268] sm:$0xff]
    %v558 = vld [vmem:[#allocation11 + $0x270] sm:$0xff]
    %v559 = vld [vmem:[#allocation11 + $0x278] sm:$0xff]
    %v560 = vld [vmem:[#allocation11 + $0x280] sm:$0xff]
    %v561 = vld [vmem:[#allocation11 + $0x288] sm:$0xff]
    %v562 = vld [vmem:[#allocation11 + $0x290] sm:$0xff]
    %v563 = vld [vmem:[#allocation11 + $0x298] sm:$0xff]
    %v564 = vld [vmem:[#allocation11 + $0x2a0] sm:$0xff]
    %v565 = vld [vmem:[#allocation11 + $0x2a8] sm:$0xff]
    %v566 = vld [vmem:[#allocation11 + $0x2b0] sm:$0xff]
    %v567 = vld [vmem:[#allocation11 + $0x2b8] sm:$0xff]
    %v568 = vld [vmem:[#allocation11 + $0x2c0] sm:$0xff]
    %v569 = vld [vmem:[#allocation11 + $0x2c8] sm:$0xff]
    %v570 = vld [vmem:[#allocation11 + $0x2d0] sm:$0xff]
    %v571 = vld [vmem:[#allocation11 + $0x2d8] sm:$0xff]
    %v572 = vld [vmem:[#allocation11 + $0x2e0] sm:$0xff]
    %v573 = vld [vmem:[#allocation11 + $0x2e8] sm:$0xff]
    %v574 = vld [vmem:[#allocation11 + $0x2f0] sm:$0xff]
    %v575 = vld [vmem:[#allocation11 + $0x2f8] sm:$0xff]
    %v576 = vld [vmem:[#allocation11 + $0x300] sm:$0xff]
    %v577 = vld [vmem:[#allocation11 + $0x308] sm:$0xff]
    %v578 = vld [vmem:[#allocation11 + $0x310] sm:$0xff]
    %v579 = vld [vmem:[#allocation11 + $0x318] sm:$0xff]
    %v580 = vld [vmem:[#allocation11 + $0x320] sm:$0xff]
    %v581 = vld [vmem:[#allocation11 + $0x328] sm:$0xff]
    %v582 = vld [vmem:[#allocation11 + $0x330] sm:$0xff]
    %v583 = vld [vmem:[#allocation11 + $0x338] sm:$0xff]
    %v584 = vld [vmem:[#allocation11 + $0x340] sm:$0xff]
    %v585 = vld [vmem:[#allocation11 + $0x348] sm:$0xff]
    %v586 = vld [vmem:[#allocation11 + $0x350] sm:$0xff]
    %v587 = vld [vmem:[#allocation11 + $0x358] sm:$0xff]
    %v588 = vld [vmem:[#allocation11 + $0x360] sm:$0xff]
    %v589 = vld [vmem:[#allocation11 + $0x368] sm:$0xff]
    %v590 = vld [vmem:[#allocation11 + $0x370] sm:$0xff]
    %v591 = vld [vmem:[#allocation11 + $0x378] sm:$0xff]
    %v592 = vld [vmem:[#allocation11 + $0x380] sm:$0xff]
    %v593 = vld [vmem:[#allocation11 + $0x388] sm:$0xff]
    %v594 = vld [vmem:[#allocation11 + $0x390] sm:$0xff]
    %v595 = vld [vmem:[#allocation11 + $0x398] sm:$0xff]
    %v596 = vld [vmem:[#allocation11 + $0x3a0] sm:$0xff]
    %v597 = vld [vmem:[#allocation11 + $0x3a8] sm:$0xff]
    %v598 = vld [vmem:[#allocation11 + $0x3b0] sm:$0xff]
    %v599 = vld [vmem:[#allocation11 + $0x3b8] sm:$0xff]
    %v600 = vld [vmem:[#allocation11 + $0x3c0] sm:$0xff]
    %v601 = vld [vmem:[#allocation11 + $0x3c8] sm:$0xff]
    %v602 = vld [vmem:[#allocation11 + $0x3d0] sm:$0xff]
    %v603 = vld [vmem:[#allocation11 + $0x3d8] sm:$0xff]
    %v604 = vld [vmem:[#allocation11 + $0x3e0] sm:$0xff]
    %v605 = vld [vmem:[#allocation11 + $0x3e8] sm:$0xff]
    %v606 = vld [vmem:[#allocation11 + $0x3f0] sm:$0xff]
    %v607 = vld [vmem:[#allocation11 + $0x3f8] sm:$0xff]
    %v608 = vld [vmem:[%s9] sm:$0xf]
    %v610 = vlaneseq
    %v611 = vshrl.u32 %v610, 7
    %v612 = vsub.s32 0, %v611
    %v613 = vrot.slane %v608, %v612
    %v614 = vlaneseq
    %v615 = vshrl.u32 %v614, 7
    %v616 = vsub.s32 1, %v615
    %v617 = vrot.slane %v608, %v616
    %v618 = vlaneseq
    %v619 = vshrl.u32 %v618, 7
    %v620 = vsub.s32 2, %v619
    %v621 = vrot.slane %v608, %v620
    %v622 = vlaneseq
    %v623 = vshrl.u32 %v622, 7
    %v624 = vsub.s32 3, %v623
    %v625 = vrot.slane %v608, %v624
    %v758 = vunpack.c.l.b16 %v480
    %v759 = vunpack.c.h.b16 %v480
    %v760 = vunpack.c.l.b16 %v481
    %v761 = vunpack.c.h.b16 %v481
    %v762 = vunpack.c.l.b16 %v482
    %v763 = vunpack.c.h.b16 %v482
    %v764 = vunpack.c.l.b16 %v483
    %v765 = vunpack.c.h.b16 %v483
    %v766 = vunpack.c.l.b16 %v484
    %v767 = vunpack.c.h.b16 %v484
    %v768 = vunpack.c.l.b16 %v485
    %v769 = vunpack.c.h.b16 %v485
    %v770 = vunpack.c.l.b16 %v486
    %v771 = vunpack.c.h.b16 %v486
    %v772 = vunpack.c.l.b16 %v487
    %v773 = vunpack.c.h.b16 %v487
    %v774 = vunpack.c.l.b16 %v488
    %v775 = vunpack.c.h.b16 %v488
    %v776 = vunpack.c.l.b16 %v489
    %v777 = vunpack.c.h.b16 %v489
    %v778 = vunpack.c.l.b16 %v490
    %v779 = vunpack.c.h.b16 %v490
    %v780 = vunpack.c.l.b16 %v491
    %v781 = vunpack.c.h.b16 %v491
    %v782 = vunpack.c.l.b16 %v492
    %v783 = vunpack.c.h.b16 %v492
    %v784 = vunpack.c.l.b16 %v493
    %v785 = vunpack.c.h.b16 %v493
    %v786 = vunpack.c.l.b16 %v494
    %v787 = vunpack.c.h.b16 %v494
    %v788 = vunpack.c.l.b16 %v495
    %v789 = vunpack.c.h.b16 %v495
    %v790 = vunpack.c.l.b16 %v496
    %v791 = vunpack.c.h.b16 %v496
    %v792 = vunpack.c.l.b16 %v497
    %v793 = vunpack.c.h.b16 %v497
    %v794 = vunpack.c.l.b16 %v498
    %v795 = vunpack.c.h.b16 %v498
    %v796 = vunpack.c.l.b16 %v499
    %v797 = vunpack.c.h.b16 %v499
    %v798 = vunpack.c.l.b16 %v500
    %v799 = vunpack.c.h.b16 %v500
    %v800 = vunpack.c.l.b16 %v501
    %v801 = vunpack.c.h.b16 %v501
    %v802 = vunpack.c.l.b16 %v502
    %v803 = vunpack.c.h.b16 %v502
    %v804 = vunpack.c.l.b16 %v503
    %v805 = vunpack.c.h.b16 %v503
    %v806 = vunpack.c.l.b16 %v504
    %v807 = vunpack.c.h.b16 %v504
    %v808 = vunpack.c.l.b16 %v505
    %v809 = vunpack.c.h.b16 %v505
    %v810 = vunpack.c.l.b16 %v506
    %v811 = vunpack.c.h.b16 %v506
    %v812 = vunpack.c.l.b16 %v507
    %v813 = vunpack.c.h.b16 %v507
    %v814 = vunpack.c.l.b16 %v508
    %v815 = vunpack.c.h.b16 %v508
    %v816 = vunpack.c.l.b16 %v509
    %v817 = vunpack.c.h.b16 %v509
    %v818 = vunpack.c.l.b16 %v510
    %v819 = vunpack.c.h.b16 %v510
    %v820 = vunpack.c.l.b16 %v511
    %v821 = vunpack.c.h.b16 %v511
    %v822 = vunpack.c.l.b16 %v512
    %v823 = vunpack.c.h.b16 %v512
    %v824 = vunpack.c.l.b16 %v513
    %v825 = vunpack.c.h.b16 %v513
    %v826 = vunpack.c.l.b16 %v514
    %v827 = vunpack.c.h.b16 %v514
    %v828 = vunpack.c.l.b16 %v515
    %v829 = vunpack.c.h.b16 %v515
    %v830 = vunpack.c.l.b16 %v516
    %v831 = vunpack.c.h.b16 %v516
    %v832 = vunpack.c.l.b16 %v517
    %v833 = vunpack.c.h.b16 %v517
    %v834 = vunpack.c.l.b16 %v518
    %v835 = vunpack.c.h.b16 %v518
    %v836 = vunpack.c.l.b16 %v519
    %v837 = vunpack.c.h.b16 %v519
    %v838 = vunpack.c.l.b16 %v520
    %v839 = vunpack.c.h.b16 %v520
    %v840 = vunpack.c.l.b16 %v521
    %v841 = vunpack.c.h.b16 %v521
    %v842 = vunpack.c.l.b16 %v522
    %v843 = vunpack.c.h.b16 %v522
    %v844 = vunpack.c.l.b16 %v523
    %v845 = vunpack.c.h.b16 %v523
    %v846 = vunpack.c.l.b16 %v524
    %v847 = vunpack.c.h.b16 %v524
    %v848 = vunpack.c.l.b16 %v525
    %v849 = vunpack.c.h.b16 %v525
    %v850 = vunpack.c.l.b16 %v526
    %v851 = vunpack.c.h.b16 %v526
    %v852 = vunpack.c.l.b16 %v527
    %v853 = vunpack.c.h.b16 %v527
    %v854 = vunpack.c.l.b16 %v528
    %v855 = vunpack.c.h.b16 %v528
    %v856 = vunpack.c.l.b16 %v529
    %v857 = vunpack.c.h.b16 %v529
    %v858 = vunpack.c.l.b16 %v530
    %v859 = vunpack.c.h.b16 %v530
    %v860 = vunpack.c.l.b16 %v531
    %v861 = vunpack.c.h.b16 %v531
    %v862 = vunpack.c.l.b16 %v532
    %v863 = vunpack.c.h.b16 %v532
    %v864 = vunpack.c.l.b16 %v533
    %v865 = vunpack.c.h.b16 %v533
    %v866 = vunpack.c.l.b16 %v534
    %v867 = vunpack.c.h.b16 %v534
    %v868 = vunpack.c.l.b16 %v535
    %v869 = vunpack.c.h.b16 %v535
    %v870 = vunpack.c.l.b16 %v536
    %v871 = vunpack.c.h.b16 %v536
    %v872 = vunpack.c.l.b16 %v537
    %v873 = vunpack.c.h.b16 %v537
    %v874 = vunpack.c.l.b16 %v538
    %v875 = vunpack.c.h.b16 %v538
    %v876 = vunpack.c.l.b16 %v539
    %v877 = vunpack.c.h.b16 %v539
    %v878 = vunpack.c.l.b16 %v540
    %v879 = vunpack.c.h.b16 %v540
    %v880 = vunpack.c.l.b16 %v541
    %v881 = vunpack.c.h.b16 %v541
    %v882 = vunpack.c.l.b16 %v542
    %v883 = vunpack.c.h.b16 %v542
    %v884 = vunpack.c.l.b16 %v543
    %v885 = vunpack.c.h.b16 %v543
    %v886 = vunpack.c.l.b16 %v544
    %v887 = vunpack.c.h.b16 %v544
    %v888 = vunpack.c.l.b16 %v545
    %v889 = vunpack.c.h.b16 %v545
    %v890 = vunpack.c.l.b16 %v546
    %v891 = vunpack.c.h.b16 %v546
    %v892 = vunpack.c.l.b16 %v547
    %v893 = vunpack.c.h.b16 %v547
    %v894 = vunpack.c.l.b16 %v548
    %v895 = vunpack.c.h.b16 %v548
    %v896 = vunpack.c.l.b16 %v549
    %v897 = vunpack.c.h.b16 %v549
    %v898 = vunpack.c.l.b16 %v550
    %v899 = vunpack.c.h.b16 %v550
    %v900 = vunpack.c.l.b16 %v551
    %v901 = vunpack.c.h.b16 %v551
    %v902 = vunpack.c.l.b16 %v552
    %v903 = vunpack.c.h.b16 %v552
    %v904 = vunpack.c.l.b16 %v553
    %v905 = vunpack.c.h.b16 %v553
    %v906 = vunpack.c.l.b16 %v554
    %v907 = vunpack.c.h.b16 %v554
    %v908 = vunpack.c.l.b16 %v555
    %v909 = vunpack.c.h.b16 %v555
    %v910 = vunpack.c.l.b16 %v556
    %v911 = vunpack.c.h.b16 %v556
    %v912 = vunpack.c.l.b16 %v557
    %v913 = vunpack.c.h.b16 %v557
    %v914 = vunpack.c.l.b16 %v558
    %v915 = vunpack.c.h.b16 %v558
    %v916 = vunpack.c.l.b16 %v559
    %v917 = vunpack.c.h.b16 %v559
    %v918 = vunpack.c.l.b16 %v560
    %v919 = vunpack.c.h.b16 %v560
    %v920 = vunpack.c.l.b16 %v561
    %v921 = vunpack.c.h.b16 %v561
    %v922 = vunpack.c.l.b16 %v562
    %v923 = vunpack.c.h.b16 %v562
    %v924 = vunpack.c.l.b16 %v563
    %v925 = vunpack.c.h.b16 %v563
    %v926 = vunpack.c.l.b16 %v564
    %v927 = vunpack.c.h.b16 %v564
    %v928 = vunpack.c.l.b16 %v565
    %v929 = vunpack.c.h.b16 %v565
    %v930 = vunpack.c.l.b16 %v566
    %v931 = vunpack.c.h.b16 %v566
    %v932 = vunpack.c.l.b16 %v567
    %v933 = vunpack.c.h.b16 %v567
    %v934 = vunpack.c.l.b16 %v568
    %v935 = vunpack.c.h.b16 %v568
    %v936 = vunpack.c.l.b16 %v569
    %v937 = vunpack.c.h.b16 %v569
    %v938 = vunpack.c.l.b16 %v570
    %v939 = vunpack.c.h.b16 %v570
    %v940 = vunpack.c.l.b16 %v571
    %v941 = vunpack.c.h.b16 %v571
    %v942 = vunpack.c.l.b16 %v572
    %v943 = vunpack.c.h.b16 %v572
    %v944 = vunpack.c.l.b16 %v573
    %v945 = vunpack.c.h.b16 %v573
    %v946 = vunpack.c.l.b16 %v574
    %v947 = vunpack.c.h.b16 %v574
    %v948 = vunpack.c.l.b16 %v575
    %v949 = vunpack.c.h.b16 %v575
    %v950 = vunpack.c.l.b16 %v576
    %v951 = vunpack.c.h.b16 %v576
    %v952 = vunpack.c.l.b16 %v577
    %v953 = vunpack.c.h.b16 %v577
    %v954 = vunpack.c.l.b16 %v578
    %v955 = vunpack.c.h.b16 %v578
    %v956 = vunpack.c.l.b16 %v579
    %v957 = vunpack.c.h.b16 %v579
    %v958 = vunpack.c.l.b16 %v580
    %v959 = vunpack.c.h.b16 %v580
    %v960 = vunpack.c.l.b16 %v581
    %v961 = vunpack.c.h.b16 %v581
    %v962 = vunpack.c.l.b16 %v582
    %v963 = vunpack.c.h.b16 %v582
    %v964 = vunpack.c.l.b16 %v583
    %v965 = vunpack.c.h.b16 %v583
    %v966 = vunpack.c.l.b16 %v584
    %v967 = vunpack.c.h.b16 %v584
    %v968 = vunpack.c.l.b16 %v585
    %v969 = vunpack.c.h.b16 %v585
    %v970 = vunpack.c.l.b16 %v586
    %v971 = vunpack.c.h.b16 %v586
    %v972 = vunpack.c.l.b16 %v587
    %v973 = vunpack.c.h.b16 %v587
    %v974 = vunpack.c.l.b16 %v588
    %v975 = vunpack.c.h.b16 %v588
    %v976 = vunpack.c.l.b16 %v589
    %v977 = vunpack.c.h.b16 %v589
    %v978 = vunpack.c.l.b16 %v590
    %v979 = vunpack.c.h.b16 %v590
    %v980 = vunpack.c.l.b16 %v591
    %v981 = vunpack.c.h.b16 %v591
    %v982 = vunpack.c.l.b16 %v592
    %v983 = vunpack.c.h.b16 %v592
    %v984 = vunpack.c.l.b16 %v593
    %v985 = vunpack.c.h.b16 %v593
    %v986 = vunpack.c.l.b16 %v594
    %v987 = vunpack.c.h.b16 %v594
    %v988 = vunpack.c.l.b16 %v595
    %v989 = vunpack.c.h.b16 %v595
    %v990 = vunpack.c.l.b16 %v596
    %v991 = vunpack.c.h.b16 %v596
    %v992 = vunpack.c.l.b16 %v597
    %v993 = vunpack.c.h.b16 %v597
    %v994 = vunpack.c.l.b16 %v598
    %v995 = vunpack.c.h.b16 %v598
    %v996 = vunpack.c.l.b16 %v599
    %v997 = vunpack.c.h.b16 %v599
    %v998 = vunpack.c.l.b16 %v600
    %v999 = vunpack.c.h.b16 %v600
    %v1000 = vunpack.c.l.b16 %v601
    %v1001 = vunpack.c.h.b16 %v601
    %v1002 = vunpack.c.l.b16 %v602
    %v1003 = vunpack.c.h.b16 %v602
    %v1004 = vunpack.c.l.b16 %v603
    %v1005 = vunpack.c.h.b16 %v603
    %v1006 = vunpack.c.l.b16 %v604
    %v1007 = vunpack.c.h.b16 %v604
    %v1008 = vunpack.c.l.b16 %v605
    %v1009 = vunpack.c.h.b16 %v605
    %v1010 = vunpack.c.l.b16 %v606
    %v1011 = vunpack.c.h.b16 %v606
    %v1012 = vunpack.c.l.b16 %v607
    %v1013 = vunpack.c.h.b16 %v607
    %v1014 = vpack.c.b16 %v762, %v758
    %v1015 = vpack.c.b16 %v763, %v759
    %v1016 = vpack.c.b16 %v764, %v760
    %v1017 = vpack.c.b16 %v765, %v761
    %v1018 = vpack.c.b16 %v770, %v766
    %v1019 = vpack.c.b16 %v771, %v767
    %v1020 = vpack.c.b16 %v772, %v768
    %v1021 = vpack.c.b16 %v773, %v769
    %v1022 = vpack.c.b16 %v778, %v774
    %v1023 = vpack.c.b16 %v779, %v775
    %v1024 = vpack.c.b16 %v780, %v776
    %v1025 = vpack.c.b16 %v781, %v777
    %v1026 = vpack.c.b16 %v786, %v782
    %v1027 = vpack.c.b16 %v787, %v783
    %v1028 = vpack.c.b16 %v788, %v784
    %v1029 = vpack.c.b16 %v789, %v785
    %v1030 = vpack.c.b16 %v794, %v790
    %v1031 = vpack.c.b16 %v795, %v791
    %v1032 = vpack.c.b16 %v796, %v792
    %v1033 = vpack.c.b16 %v797, %v793
    %v1034 = vpack.c.b16 %v802, %v798
    %v1035 = vpack.c.b16 %v803, %v799
    %v1036 = vpack.c.b16 %v804, %v800
    %v1037 = vpack.c.b16 %v805, %v801
    %v1038 = vpack.c.b16 %v810, %v806
    %v1039 = vpack.c.b16 %v811, %v807
    %v1040 = vpack.c.b16 %v812, %v808
    %v1041 = vpack.c.b16 %v813, %v809
    %v1042 = vpack.c.b16 %v818, %v814
    %v1043 = vpack.c.b16 %v819, %v815
    %v1044 = vpack.c.b16 %v820, %v816
    %v1045 = vpack.c.b16 %v821, %v817
    %v1046 = vpack.c.b16 %v826, %v822
    %v1047 = vpack.c.b16 %v827, %v823
    %v1048 = vpack.c.b16 %v828, %v824
    %v1049 = vpack.c.b16 %v829, %v825
    %v1050 = vpack.c.b16 %v834, %v830
    %v1051 = vpack.c.b16 %v835, %v831
    %v1052 = vpack.c.b16 %v836, %v832
    %v1053 = vpack.c.b16 %v837, %v833
    %v1054 = vpack.c.b16 %v842, %v838
    %v1055 = vpack.c.b16 %v843, %v839
    %v1056 = vpack.c.b16 %v844, %v840
    %v1057 = vpack.c.b16 %v845, %v841
    %v1058 = vpack.c.b16 %v850, %v846
    %v1059 = vpack.c.b16 %v851, %v847
    %v1060 = vpack.c.b16 %v852, %v848
    %v1061 = vpack.c.b16 %v853, %v849
    %v1062 = vpack.c.b16 %v858, %v854
    %v1063 = vpack.c.b16 %v859, %v855
    %v1064 = vpack.c.b16 %v860, %v856
    %v1065 = vpack.c.b16 %v861, %v857
    %v1066 = vpack.c.b16 %v866, %v862
    %v1067 = vpack.c.b16 %v867, %v863
    %v1068 = vpack.c.b16 %v868, %v864
    %v1069 = vpack.c.b16 %v869, %v865
    %v1070 = vpack.c.b16 %v874, %v870
    %v1071 = vpack.c.b16 %v875, %v871
    %v1072 = vpack.c.b16 %v876, %v872
    %v1073 = vpack.c.b16 %v877, %v873
    %v1074 = vpack.c.b16 %v882, %v878
    %v1075 = vpack.c.b16 %v883, %v879
    %v1076 = vpack.c.b16 %v884, %v880
    %v1077 = vpack.c.b16 %v885, %v881
    %v1078 = vpack.c.b16 %v890, %v886
    %v1079 = vpack.c.b16 %v891, %v887
    %v1080 = vpack.c.b16 %v892, %v888
    %v1081 = vpack.c.b16 %v893, %v889
    %v1082 = vpack.c.b16 %v898, %v894
    %v1083 = vpack.c.b16 %v899, %v895
    %v1084 = vpack.c.b16 %v900, %v896
    %v1085 = vpack.c.b16 %v901, %v897
    %v1086 = vpack.c.b16 %v906, %v902
    %v1087 = vpack.c.b16 %v907, %v903
    %v1088 = vpack.c.b16 %v908, %v904
    %v1089 = vpack.c.b16 %v909, %v905
    %v1090 = vpack.c.b16 %v914, %v910
    %v1091 = vpack.c.b16 %v915, %v911
    %v1092 = vpack.c.b16 %v916, %v912
    %v1093 = vpack.c.b16 %v917, %v913
    %v1094 = vpack.c.b16 %v922, %v918
    %v1095 = vpack.c.b16 %v923, %v919
    %v1096 = vpack.c.b16 %v924, %v920
    %v1097 = vpack.c.b16 %v925, %v921
    %v1098 = vpack.c.b16 %v930, %v926
    %v1099 = vpack.c.b16 %v931, %v927
    %v1100 = vpack.c.b16 %v932, %v928
    %v1101 = vpack.c.b16 %v933, %v929
    %v1102 = vpack.c.b16 %v938, %v934
    %v1103 = vpack.c.b16 %v939, %v935
    %v1104 = vpack.c.b16 %v940, %v936
    %v1105 = vpack.c.b16 %v941, %v937
    %v1106 = vpack.c.b16 %v946, %v942
    %v1107 = vpack.c.b16 %v947, %v943
    %v1108 = vpack.c.b16 %v948, %v944
    %v1109 = vpack.c.b16 %v949, %v945
    %v1110 = vpack.c.b16 %v954, %v950
    %v1111 = vpack.c.b16 %v955, %v951
    %v1112 = vpack.c.b16 %v956, %v952
    %v1113 = vpack.c.b16 %v957, %v953
    %v1114 = vpack.c.b16 %v962, %v958
    %v1115 = vpack.c.b16 %v963, %v959
    %v1116 = vpack.c.b16 %v964, %v960
    %v1117 = vpack.c.b16 %v965, %v961
    %v1118 = vpack.c.b16 %v970, %v966
    %v1119 = vpack.c.b16 %v971, %v967
    %v1120 = vpack.c.b16 %v972, %v968
    %v1121 = vpack.c.b16 %v973, %v969
    %v1122 = vpack.c.b16 %v978, %v974
    %v1123 = vpack.c.b16 %v979, %v975
    %v1124 = vpack.c.b16 %v980, %v976
    %v1125 = vpack.c.b16 %v981, %v977
    %v1126 = vpack.c.b16 %v986, %v982
    %v1127 = vpack.c.b16 %v987, %v983
    %v1128 = vpack.c.b16 %v988, %v984
    %v1129 = vpack.c.b16 %v989, %v985
    %v1130 = vpack.c.b16 %v994, %v990
    %v1131 = vpack.c.b16 %v995, %v991
    %v1132 = vpack.c.b16 %v996, %v992
    %v1133 = vpack.c.b16 %v997, %v993
    %v1134 = vpack.c.b16 %v1002, %v998
    %v1135 = vpack.c.b16 %v1003, %v999
    %v1136 = vpack.c.b16 %v1004, %v1000
    %v1137 = vpack.c.b16 %v1005, %v1001
    %v1138 = vpack.c.b16 %v1010, %v1006
    %v1139 = vpack.c.b16 %v1011, %v1007
    %v1140 = vpack.c.b16 %v1012, %v1008
    %v1141 = vpack.c.b16 %v1013, %v1009
    %1270 = vmatprep.subr.bf16.mxu0 %v1015
    %1271 = vmatpush1.bf16.msra.mxu0 %v1014
    %1272 = vmatprep.subr.bf16.mxu0 %v1019
    %1273 = vmatpush1.bf16.msra.mxu0 %v1018
    %1274 = vmatprep.subr.bf16.mxu0 %v1023
    %1275 = vmatpush1.bf16.msra.mxu0 %v1022
    %1276 = vmatprep.subr.bf16.mxu0 %v1027
    %1277 = vmatpush1.bf16.msra.mxu0 %v1026
    %1278 = vmatprep.subr.bf16.mxu0 %v1031
    %1279 = vmatpush1.bf16.msra.mxu0 %v1030
    %1280 = vmatprep.subr.bf16.mxu0 %v1035
    %1281 = vmatpush1.bf16.msra.mxu0 %v1034
    %1282 = vmatprep.subr.bf16.mxu0 %v1039
    %1283 = vmatpush1.bf16.msra.mxu0 %v1038
    %1284 = vmatprep.subr.bf16.mxu0 %v1043
    %1285 = vmatpush1.bf16.msra.mxu0 %v1042
    %1286 = vmatprep.subr.bf16.mxu0 %v1047
    %1287 = vmatpush1.bf16.msra.mxu0 %v1046
    %1288 = vmatprep.subr.bf16.mxu0 %v1051
    %1289 = vmatpush1.bf16.msra.mxu0 %v1050
    %1290 = vmatprep.subr.bf16.mxu0 %v1055
    %1291 = vmatpush1.bf16.msra.mxu0 %v1054
    %1292 = vmatprep.subr.bf16.mxu0 %v1059
    %1293 = vmatpush1.bf16.msra.mxu0 %v1058
    %1294 = vmatprep.subr.bf16.mxu0 %v1063
    %1295 = vmatpush1.bf16.msra.mxu0 %v1062
    %1296 = vmatprep.subr.bf16.mxu0 %v1067
    %1297 = vmatpush1.bf16.msra.mxu0 %v1066
    %1298 = vmatprep.subr.bf16.mxu0 %v1071
    %1299 = vmatpush1.bf16.msra.mxu0 %v1070
    %1300 = vmatprep.subr.bf16.mxu0 %v1075
    %1301 = vmatpush1.bf16.msra.mxu0 %v1074
    %1302 = vmatprep.mubr.bf16.mxu0 %v477
    %1303 = vmatmul.mubr.bf16.gmra.mrb[0].mxu0 %v476
    %v1304 = vpop.f32.mrb[0].mxu0
    %v1305 = vadd.f32 %v613, %v1304
    %v1306 = vpop.f32.mrb[0].mxu0
    %v1307 = vadd.f32 %v617, %v1306
    %v1308 = vpop.f32.mrb[0].mxu0
    %v1309 = vpop.f32.mrb[0].mxu0
    %1310 = vdwg.mxu0
    %1311 = vmatprep.subr.bf16.mxu0 %v1079
    %1312 = vmatpush1.bf16.msra.mxu0 %v1078
    %1313 = vmatprep.subr.bf16.mxu0 %v1083
    %1314 = vmatpush1.bf16.msra.mxu0 %v1082
    %1315 = vmatprep.subr.bf16.mxu0 %v1087
    %1316 = vmatpush1.bf16.msra.mxu0 %v1086
    %1317 = vmatprep.subr.bf16.mxu0 %v1091
    %1318 = vmatpush1.bf16.msra.mxu0 %v1090
    %1319 = vmatprep.subr.bf16.mxu0 %v1095
    %1320 = vmatpush1.bf16.msra.mxu0 %v1094
    %1321 = vmatprep.subr.bf16.mxu0 %v1099
    %1322 = vmatpush1.bf16.msra.mxu0 %v1098
    %1323 = vmatprep.subr.bf16.mxu0 %v1103
    %1324 = vmatpush1.bf16.msra.mxu0 %v1102
    %1325 = vmatprep.subr.bf16.mxu0 %v1107
    %1326 = vmatpush1.bf16.msra.mxu0 %v1106
    %1327 = vmatprep.subr.bf16.mxu0 %v1111
    %1328 = vmatpush1.bf16.msra.mxu0 %v1110
    %1329 = vmatprep.subr.bf16.mxu0 %v1115
    %1330 = vmatpush1.bf16.msra.mxu0 %v1114
    %1331 = vmatprep.subr.bf16.mxu0 %v1119
    %1332 = vmatpush1.bf16.msra.mxu0 %v1118
    %1333 = vmatprep.subr.bf16.mxu0 %v1123
    %1334 = vmatpush1.bf16.msra.mxu0 %v1122
    %1335 = vmatprep.subr.bf16.mxu0 %v1127
    %1336 = vmatpush1.bf16.msra.mxu0 %v1126
    %1337 = vmatprep.subr.bf16.mxu0 %v1131
    %1338 = vmatpush1.bf16.msra.mxu0 %v1130
    %1339 = vmatprep.subr.bf16.mxu0 %v1135
    %1340 = vmatpush1.bf16.msra.mxu0 %v1134
    %1341 = vmatprep.subr.bf16.mxu0 %v1139
    %1342 = vmatpush1.bf16.msra.mxu0 %v1138
    %1343 = vmatprep.mubr.bf16.mxu0 %v479
    %1344 = vmatmul.mubr.bf16.gmra.mrb[0].mxu0 %v478
    %v1345 = vpop.f32.mrb[0].mxu0
    %v1346 = vadd.f32 %v1305, %v1345
    %v1347 = vpop.f32.mrb[0].mxu0
    %v1348 = vadd.f32 %v1307, %v1347
    %v1349 = vpop.f32.mrb[0].mxu0
    %v1350 = vpop.f32.mrb[0].mxu0
    %1351 = vdwg.mxu0
    %1352 = vmatprep.subr.bf16.mxu0 %v1017
    %1353 = vmatpush1.bf16.msra.mxu0 %v1016
    %1354 = vmatprep.subr.bf16.mxu0 %v1021
    %1355 = vmatpush1.bf16.msra.mxu0 %v1020
    %1356 = vmatprep.subr.bf16.mxu0 %v1025
    %1357 = vmatpush1.bf16.msra.mxu0 %v1024
    %1358 = vmatprep.subr.bf16.mxu0 %v1029
    %1359 = vmatpush1.bf16.msra.mxu0 %v1028
    %1360 = vmatprep.subr.bf16.mxu0 %v1033
    %1361 = vmatpush1.bf16.msra.mxu0 %v1032
    %1362 = vmatprep.subr.bf16.mxu0 %v1037
    %1363 = vmatpush1.bf16.msra.mxu0 %v1036
    %1364 = vmatprep.subr.bf16.mxu0 %v1041
    %1365 = vmatpush1.bf16.msra.mxu0 %v1040
    %1366 = vmatprep.subr.bf16.mxu0 %v1045
    %1367 = vmatpush1.bf16.msra.mxu0 %v1044
    %1368 = vmatprep.subr.bf16.mxu0 %v1049
    %1369 = vmatpush1.bf16.msra.mxu0 %v1048
    %1370 = vmatprep.subr.bf16.mxu0 %v1053
    %1371 = vmatpush1.bf16.msra.mxu0 %v1052
    %1372 = vmatprep.subr.bf16.mxu0 %v1057
    %1373 = vmatpush1.bf16.msra.mxu0 %v1056
    %1374 = vmatprep.subr.bf16.mxu0 %v1061
    %1375 = vmatpush1.bf16.msra.mxu0 %v1060
    %1376 = vmatprep.subr.bf16.mxu0 %v1065
    %1377 = vmatpush1.bf16.msra.mxu0 %v1064
    %1378 = vmatprep.subr.bf16.mxu0 %v1069
    %1379 = vmatpush1.bf16.msra.mxu0 %v1068
    %1380 = vmatprep.subr.bf16.mxu0 %v1073
    %1381 = vmatpush1.bf16.msra.mxu0 %v1072
    %1382 = vmatprep.subr.bf16.mxu0 %v1077
    %1383 = vmatpush1.bf16.msra.mxu0 %v1076
    %1384 = vmatprep.mubr.bf16.mxu0 %v477
    %1385 = vmatmul.mubr.bf16.gmra.mrb[0].mxu0 %v476
    %v1386 = vpop.f32.mrb[0].mxu0
    %v1387 = vadd.f32 %v621, %v1386
    %v1388 = vpop.f32.mrb[0].mxu0
    %v1389 = vadd.f32 %v625, %v1388
    %v1390 = vpop.f32.mrb[0].mxu0
    %v1391 = vpop.f32.mrb[0].mxu0
    %1392 = vdwg.mxu0
    %1393 = vmatprep.subr.bf16.mxu0 %v1081
    %1394 = vmatpush1.bf16.msra.mxu0 %v1080
    %1395 = vmatprep.subr.bf16.mxu0 %v1085
    %1396 = vmatpush1.bf16.msra.mxu0 %v1084
    %1397 = vmatprep.subr.bf16.mxu0 %v1089
    %1398 = vmatpush1.bf16.msra.mxu0 %v1088
    %1399 = vmatprep.subr.bf16.mxu0 %v1093
    %1400 = vmatpush1.bf16.msra.mxu0 %v1092
    %1401 = vmatprep.subr.bf16.mxu0 %v1097
    %1402 = vmatpush1.bf16.msra.mxu0 %v1096
    %1403 = vmatprep.subr.bf16.mxu0 %v1101
    %1404 = vmatpush1.bf16.msra.mxu0 %v1100
    %1405 = vmatprep.subr.bf16.mxu0 %v1105
    %1406 = vmatpush1.bf16.msra.mxu0 %v1104
    %1407 = vmatprep.subr.bf16.mxu0 %v1109
    %1408 = vmatpush1.bf16.msra.mxu0 %v1108
    %1409 = vmatprep.subr.bf16.mxu0 %v1113
    %1410 = vmatpush1.bf16.msra.mxu0 %v1112
    %1411 = vmatprep.subr.bf16.mxu0 %v1117
    %1412 = vmatpush1.bf16.msra.mxu0 %v1116
    %1413 = vmatprep.subr.bf16.mxu0 %v1121
    %1414 = vmatpush1.bf16.msra.mxu0 %v1120
    %1415 = vmatprep.subr.bf16.mxu0 %v1125
    %1416 = vmatpush1.bf16.msra.mxu0 %v1124
    %1417 = vmatprep.subr.bf16.mxu0 %v1129
    %1418 = vmatpush1.bf16.msra.mxu0 %v1128
    %1419 = vmatprep.subr.bf16.mxu0 %v1133
    %1420 = vmatpush1.bf16.msra.mxu0 %v1132
    %1421 = vmatprep.subr.bf16.mxu0 %v1137
    %1422 = vmatpush1.bf16.msra.mxu0 %v1136
    %1423 = vmatprep.subr.bf16.mxu0 %v1141
    %1424 = vmatpush1.bf16.msra.mxu0 %v1140
    %1425 = vmatprep.mubr.bf16.mxu0 %v479
    %1426 = vmatmul.mubr.bf16.gmra.mrb[0].mxu0 %v478
    %v1427 = vpop.f32.mrb[0].mxu0
    %v1428 = vadd.f32 %v1387, %v1427
    %v1429 = vpop.f32.mrb[0].mxu0
    %v1430 = vadd.f32 %v1389, %v1429
    %v1431 = vpop.f32.mrb[0].mxu0
    %v1432 = vpop.f32.mrb[0].mxu0
    %1433 = vdwg.mxu0
    %v1434 = vmax.f32 %v1346, 0.0
    %v1435 = vmax.f32 %v1348, 0.0
    %v1436 = vmax.f32 %v1428, 0.0
    %v1437 = vmax.f32 %v1430, 0.0
    %v1438 = vpack.c.bf16 %v1434, %v1434
    %v1439 = vpack.c.bf16 %v1435, %v1435
    %v1440 = vpack.c.bf16 %v1436, %v1436
    %v1441 = vpack.c.bf16 %v1437, %v1437
    %v1442 = vld [vmem:[#allocation8] sm:$0xf]
    %v1443 = vld [vmem:[#allocation8 + $0x4] sm:$0xf]
    %v1444 = vld [vmem:[#allocation8 + $0x8] sm:$0xf]
    %v1445 = vld [vmem:[#allocation8 + $0xc] sm:$0xf]
    %v1446 = vld [vmem:[#allocation8 + $0x10] sm:$0xf]
    %v1447 = vld [vmem:[#allocation8 + $0x14] sm:$0xf]
    %v1448 = vld [vmem:[#allocation8 + $0x18] sm:$0xf]
    %v1449 = vld [vmem:[#allocation8 + $0x1c] sm:$0xf]
    %v1450 = vld [vmem:[#allocation8 + $0x20] sm:$0xf]
    %v1451 = vld [vmem:[#allocation8 + $0x24] sm:$0xf]
    %v1452 = vld [vmem:[#allocation8 + $0x28] sm:$0xf]
    %v1453 = vld [vmem:[#allocation8 + $0x2c] sm:$0xf]
    %v1454 = vld [vmem:[#allocation8 + $0x30] sm:$0xf]
    %v1455 = vld [vmem:[#allocation8 + $0x34] sm:$0xf]
    %v1456 = vld [vmem:[#allocation8 + $0x38] sm:$0xf]
    %v1457 = vld [vmem:[#allocation8 + $0x3c] sm:$0xf]
    %v1458 = vld [vmem:[#allocation13] sm:$0xf]
    %v1459 = vld [vmem:[#allocation13 + $0x4] sm:$0xf]
    %v1460 = vld [vmem:[#allocation13 + $0x8] sm:$0xf]
    %v1461 = vld [vmem:[#allocation13 + $0xc] sm:$0xf]
    %v1462 = vld [vmem:[#allocation13 + $0x10] sm:$0xf]
    %v1463 = vld [vmem:[#allocation13 + $0x14] sm:$0xf]
    %v1464 = vld [vmem:[#allocation13 + $0x18] sm:$0xf]
    %v1465 = vld [vmem:[#allocation13 + $0x1c] sm:$0xf]
    %v1466 = vld [vmem:[#allocation13 + $0x20] sm:$0xf]
    %v1467 = vld [vmem:[#allocation13 + $0x24] sm:$0xf]
    %v1468 = vld [vmem:[#allocation13 + $0x28] sm:$0xf]
    %v1469 = vld [vmem:[#allocation13 + $0x2c] sm:$0xf]
    %v1470 = vld [vmem:[#allocation13 + $0x30] sm:$0xf]
    %v1471 = vld [vmem:[#allocation13 + $0x34] sm:$0xf]
    %v1472 = vld [vmem:[#allocation13 + $0x38] sm:$0xf]
    %v1473 = vld [vmem:[#allocation13 + $0x3c] sm:$0xf]
    %v1474 = vld [vmem:[#allocation13 + $0x40] sm:$0xf]
    %v1475 = vld [vmem:[#allocation13 + $0x44] sm:$0xf]
    %v1476 = vld [vmem:[#allocation13 + $0x48] sm:$0xf]
    %v1477 = vld [vmem:[#allocation13 + $0x4c] sm:$0xf]
    %v1478 = vld [vmem:[#allocation13 + $0x50] sm:$0xf]
    %v1479 = vld [vmem:[#allocation13 + $0x54] sm:$0xf]
    %v1480 = vld [vmem:[#allocation13 + $0x58] sm:$0xf]
    %v1481 = vld [vmem:[#allocation13 + $0x5c] sm:$0xf]
    %v1482 = vld [vmem:[#allocation13 + $0x60] sm:$0xf]
    %v1483 = vld [vmem:[#allocation13 + $0x64] sm:$0xf]
    %v1484 = vld [vmem:[#allocation13 + $0x68] sm:$0xf]
    %v1485 = vld [vmem:[#allocation13 + $0x6c] sm:$0xf]
    %v1486 = vld [vmem:[#allocation13 + $0x70] sm:$0xf]
    %v1487 = vld [vmem:[#allocation13 + $0x74] sm:$0xf]
    %v1488 = vld [vmem:[#allocation13 + $0x78] sm:$0xf]
    %v1489 = vld [vmem:[#allocation13 + $0x7c] sm:$0xf]
    %v1490 = vld [vmem:[#allocation13 + $0x80] sm:$0xf]
    %v1491 = vld [vmem:[#allocation13 + $0x84] sm:$0xf]
    %v1492 = vld [vmem:[#allocation13 + $0x88] sm:$0xf]
    %v1493 = vld [vmem:[#allocation13 + $0x8c] sm:$0xf]
    %v1494 = vld [vmem:[#allocation13 + $0x90] sm:$0xf]
    %v1495 = vld [vmem:[#allocation13 + $0x94] sm:$0xf]
    %v1496 = vld [vmem:[#allocation13 + $0x98] sm:$0xf]
    %v1497 = vld [vmem:[#allocation13 + $0x9c] sm:$0xf]
    %v1498 = vld [vmem:[#allocation13 + $0xa0] sm:$0xf]
    %v1499 = vld [vmem:[#allocation13 + $0xa4] sm:$0xf]
    %v1500 = vld [vmem:[#allocation13 + $0xa8] sm:$0xf]
    %v1501 = vld [vmem:[#allocation13 + $0xac] sm:$0xf]
    %v1502 = vld [vmem:[#allocation13 + $0xb0] sm:$0xf]
    %v1503 = vld [vmem:[#allocation13 + $0xb4] sm:$0xf]
    %v1504 = vld [vmem:[#allocation13 + $0xb8] sm:$0xf]
    %v1505 = vld [vmem:[#allocation13 + $0xbc] sm:$0xf]
    %v1506 = vld [vmem:[#allocation13 + $0xc0] sm:$0xf]
    %v1507 = vld [vmem:[#allocation13 + $0xc4] sm:$0xf]
    %v1508 = vld [vmem:[#allocation13 + $0xc8] sm:$0xf]
    %v1509 = vld [vmem:[#allocation13 + $0xcc] sm:$0xf]
    %v1510 = vld [vmem:[#allocation13 + $0xd0] sm:$0xf]
    %v1511 = vld [vmem:[#allocation13 + $0xd4] sm:$0xf]
    %v1512 = vld [vmem:[#allocation13 + $0xd8] sm:$0xf]
    %v1513 = vld [vmem:[#allocation13 + $0xdc] sm:$0xf]
    %v1514 = vld [vmem:[#allocation13 + $0xe0] sm:$0xf]
    %v1515 = vld [vmem:[#allocation13 + $0xe4] sm:$0xf]
    %v1516 = vld [vmem:[#allocation13 + $0xe8] sm:$0xf]
    %v1517 = vld [vmem:[#allocation13 + $0xec] sm:$0xf]
    %v1518 = vld [vmem:[#allocation13 + $0xf0] sm:$0xf]
    %v1519 = vld [vmem:[#allocation13 + $0xf4] sm:$0xf]
    %v1520 = vld [vmem:[#allocation13 + $0xf8] sm:$0xf]
    %v1521 = vld [vmem:[#allocation13 + $0xfc] sm:$0xf]
    %v1586 = vunpack.c.l.b16 %v1458
    %v1587 = vunpack.c.l.b16 %v1459
    %v1588 = vunpack.c.l.b16 %v1460
    %v1589 = vunpack.c.l.b16 %v1461
    %v1590 = vunpack.c.l.b16 %v1462
    %v1591 = vunpack.c.l.b16 %v1463
    %v1592 = vunpack.c.l.b16 %v1464
    %v1593 = vunpack.c.l.b16 %v1465
    %v1594 = vunpack.c.l.b16 %v1466
    %v1595 = vunpack.c.l.b16 %v1467
    %v1596 = vunpack.c.l.b16 %v1468
    %v1597 = vunpack.c.l.b16 %v1469
    %v1598 = vunpack.c.l.b16 %v1470
    %v1599 = vunpack.c.l.b16 %v1471
    %v1600 = vunpack.c.l.b16 %v1472
    %v1601 = vunpack.c.l.b16 %v1473
    %v1602 = vunpack.c.l.b16 %v1474
    %v1603 = vunpack.c.l.b16 %v1475
    %v1604 = vunpack.c.l.b16 %v1476
    %v1605 = vunpack.c.l.b16 %v1477
    %v1606 = vunpack.c.l.b16 %v1478
    %v1607 = vunpack.c.l.b16 %v1479
    %v1608 = vunpack.c.l.b16 %v1480
    %v1609 = vunpack.c.l.b16 %v1481
    %v1610 = vunpack.c.l.b16 %v1482
    %v1611 = vunpack.c.l.b16 %v1483
    %v1612 = vunpack.c.l.b16 %v1484
    %v1613 = vunpack.c.l.b16 %v1485
    %v1614 = vunpack.c.l.b16 %v1486
    %v1615 = vunpack.c.l.b16 %v1487
    %v1616 = vunpack.c.l.b16 %v1488
    %v1617 = vunpack.c.l.b16 %v1489
    %v1618 = vunpack.c.l.b16 %v1490
    %v1619 = vunpack.c.l.b16 %v1491
    %v1620 = vunpack.c.l.b16 %v1492
    %v1621 = vunpack.c.l.b16 %v1493
    %v1622 = vunpack.c.l.b16 %v1494
    %v1623 = vunpack.c.l.b16 %v1495
    %v1624 = vunpack.c.l.b16 %v1496
    %v1625 = vunpack.c.l.b16 %v1497
    %v1626 = vunpack.c.l.b16 %v1498
    %v1627 = vunpack.c.l.b16 %v1499
    %v1628 = vunpack.c.l.b16 %v1500
    %v1629 = vunpack.c.l.b16 %v1501
    %v1630 = vunpack.c.l.b16 %v1502
    %v1631 = vunpack.c.l.b16 %v1503
    %v1632 = vunpack.c.l.b16 %v1504
    %v1633 = vunpack.c.l.b16 %v1505
    %v1634 = vunpack.c.l.b16 %v1506
    %v1635 = vunpack.c.l.b16 %v1507
    %v1636 = vunpack.c.l.b16 %v1508
    %v1637 = vunpack.c.l.b16 %v1509
    %v1638 = vunpack.c.l.b16 %v1510
    %v1639 = vunpack.c.l.b16 %v1511
    %v1640 = vunpack.c.l.b16 %v1512
    %v1641 = vunpack.c.l.b16 %v1513
    %v1642 = vunpack.c.l.b16 %v1514
    %v1643 = vunpack.c.l.b16 %v1515
    %v1644 = vunpack.c.l.b16 %v1516
    %v1645 = vunpack.c.l.b16 %v1517
    %v1646 = vunpack.c.l.b16 %v1518
    %v1647 = vunpack.c.l.b16 %v1519
    %v1648 = vunpack.c.l.b16 %v1520
    %v1649 = vunpack.c.l.b16 %v1521
    %v1650 = vpack.c.b16 %v1587, %v1586
    %v1651 = vpack.c.b16 %v1589, %v1588
    %v1652 = vpack.c.b16 %v1591, %v1590
    %v1653 = vpack.c.b16 %v1593, %v1592
    %v1654 = vpack.c.b16 %v1595, %v1594
    %v1655 = vpack.c.b16 %v1597, %v1596
    %v1656 = vpack.c.b16 %v1599, %v1598
    %v1657 = vpack.c.b16 %v1601, %v1600
    %v1658 = vpack.c.b16 %v1603, %v1602
    %v1659 = vpack.c.b16 %v1605, %v1604
    %v1660 = vpack.c.b16 %v1607, %v1606
    %v1661 = vpack.c.b16 %v1609, %v1608
    %v1662 = vpack.c.b16 %v1611, %v1610
    %v1663 = vpack.c.b16 %v1613, %v1612
    %v1664 = vpack.c.b16 %v1615, %v1614
    %v1665 = vpack.c.b16 %v1617, %v1616
    %v1666 = vpack.c.b16 %v1619, %v1618
    %v1667 = vpack.c.b16 %v1621, %v1620
    %v1668 = vpack.c.b16 %v1623, %v1622
    %v1669 = vpack.c.b16 %v1625, %v1624
    %v1670 = vpack.c.b16 %v1627, %v1626
    %v1671 = vpack.c.b16 %v1629, %v1628
    %v1672 = vpack.c.b16 %v1631, %v1630
    %v1673 = vpack.c.b16 %v1633, %v1632
    %v1674 = vpack.c.b16 %v1635, %v1634
    %v1675 = vpack.c.b16 %v1637, %v1636
    %v1676 = vpack.c.b16 %v1639, %v1638
    %v1677 = vpack.c.b16 %v1641, %v1640
    %v1678 = vpack.c.b16 %v1643, %v1642
    %v1679 = vpack.c.b16 %v1645, %v1644
    %v1680 = vpack.c.b16 %v1647, %v1646
    %v1681 = vpack.c.b16 %v1649, %v1648
    %1714 = vmatprep.subr.bf16.mxu0 0
    %1715 = vmatpush1.bf16.msra.mxu0 %v1650
    %1716 = vmatprep.subr.bf16.mxu0 0
    %1717 = vmatpush1.bf16.msra.mxu0 %v1651
    %1718 = vmatprep.subr.bf16.mxu0 0
    %1719 = vmatpush1.bf16.msra.mxu0 %v1652
    %1720 = vmatprep.subr.bf16.mxu0 0
    %1721 = vmatpush1.bf16.msra.mxu0 %v1653
    %1722 = vmatprep.subr.bf16.mxu0 0
    %1723 = vmatpush1.bf16.msra.mxu0 %v1654
    %1724 = vmatprep.subr.bf16.mxu0 0
    %1725 = vmatpush1.bf16.msra.mxu0 %v1655
    %1726 = vmatprep.subr.bf16.mxu0 0
    %1727 = vmatpush1.bf16.msra.mxu0 %v1656
    %1728 = vmatprep.subr.bf16.mxu0 0
    %1729 = vmatpush1.bf16.msra.mxu0 %v1657
    %1730 = vmatprep.subr.bf16.mxu0 0
    %1731 = vmatpush1.bf16.msra.mxu0 %v1658
    %1732 = vmatprep.subr.bf16.mxu0 0
    %1733 = vmatpush1.bf16.msra.mxu0 %v1659
    %1734 = vmatprep.subr.bf16.mxu0 0
    %1735 = vmatpush1.bf16.msra.mxu0 %v1660
    %1736 = vmatprep.subr.bf16.mxu0 0
    %1737 = vmatpush1.bf16.msra.mxu0 %v1661
    %1738 = vmatprep.subr.bf16.mxu0 0
    %1739 = vmatpush1.bf16.msra.mxu0 %v1662
    %1740 = vmatprep.subr.bf16.mxu0 0
    %1741 = vmatpush1.bf16.msra.mxu0 %v1663
    %1742 = vmatprep.subr.bf16.mxu0 0
    %1743 = vmatpush1.bf16.msra.mxu0 %v1664
    %1744 = vmatprep.subr.bf16.mxu0 0
    %1745 = vmatpush1.bf16.msra.mxu0 %v1665
    %1746 = vmatprep.mubr.bf16.mxu0 %v1439
    %1747 = vmatmul.mubr.bf16.gmra.mrb[0].mxu0 %v1438
    %v1748 = vpop.f32.mrb[0].mxu0
    %v1749 = vadd.f32 0.0, %v1748
    %v1750 = vpop.f32.mrb[0].mxu0
    %v1751 = vpop.f32.mrb[0].mxu0
    %v1752 = vpop.f32.mrb[0].mxu0
    %1753 = vdwg.mxu0
    %1754 = vmatprep.subr.bf16.mxu0 0
    %1755 = vmatpush1.bf16.msra.mxu0 %v1666
    %1756 = vmatprep.subr.bf16.mxu0 0
    %1757 = vmatpush1.bf16.msra.mxu0 %v1667
    %1758 = vmatprep.subr.bf16.mxu0 0
    %1759 = vmatpush1.bf16.msra.mxu0 %v1668
    %1760 = vmatprep.subr.bf16.mxu0 0
    %1761 = vmatpush1.bf16.msra.mxu0 %v1669
    %1762 = vmatprep.subr.bf16.mxu0 0
    %1763 = vmatpush1.bf16.msra.mxu0 %v1670
    %1764 = vmatprep.subr.bf16.mxu0 0
    %1765 = vmatpush1.bf16.msra.mxu0 %v1671
    %1766 = vmatprep.subr.bf16.mxu0 0
    %1767 = vmatpush1.bf16.msra.mxu0 %v1672
    %1768 = vmatprep.subr.bf16.mxu0 0
    %1769 = vmatpush1.bf16.msra.mxu0 %v1673
    %1770 = vmatprep.subr.bf16.mxu0 0
    %1771 = vmatpush1.bf16.msra.mxu0 %v1674
    %1772 = vmatprep.subr.bf16.mxu0 0
    %1773 = vmatpush1.bf16.msra.mxu0 %v1675
    %1774 = vmatprep.subr.bf16.mxu0 0
    %1775 = vmatpush1.bf16.msra.mxu0 %v1676
    %1776 = vmatprep.subr.bf16.mxu0 0
    %1777 = vmatpush1.bf16.msra.mxu0 %v1677
    %1778 = vmatprep.subr.bf16.mxu0 0
    %1779 = vmatpush1.bf16.msra.mxu0 %v1678
    %1780 = vmatprep.subr.bf16.mxu0 0
    %1781 = vmatpush1.bf16.msra.mxu0 %v1679
    %1782 = vmatprep.subr.bf16.mxu0 0
    %1783 = vmatpush1.bf16.msra.mxu0 %v1680
    %1784 = vmatprep.subr.bf16.mxu0 0
    %1785 = vmatpush1.bf16.msra.mxu0 %v1681
    %1786 = vmatprep.mubr.bf16.mxu0 %v1441
    %1787 = vmatmul.mubr.bf16.gmra.mrb[0].mxu0 %v1440
    %v1788 = vpop.f32.mrb[0].mxu0
    %v1789 = vadd.f32 %v1749, %v1788
    %v1790 = vpop.f32.mrb[0].mxu0
    %v1791 = vpop.f32.mrb[0].mxu0
    %v1792 = vpop.f32.mrb[0].mxu0
    %1793 = vdwg.mxu0
    %v1810 = vunpack.c.l.b16 %v1442
    %v1811 = vunpack.c.l.b16 %v1443
    %v1812 = vunpack.c.l.b16 %v1444
    %v1813 = vunpack.c.l.b16 %v1445
    %v1814 = vunpack.c.l.b16 %v1446
    %v1815 = vunpack.c.l.b16 %v1447
    %v1816 = vunpack.c.l.b16 %v1448
    %v1817 = vunpack.c.l.b16 %v1449
    %v1818 = vunpack.c.l.b16 %v1450
    %v1819 = vunpack.c.l.b16 %v1451
    %v1820 = vunpack.c.l.b16 %v1452
    %v1821 = vunpack.c.l.b16 %v1453
    %v1822 = vunpack.c.l.b16 %v1454
    %v1823 = vunpack.c.l.b16 %v1455
    %v1824 = vunpack.c.l.b16 %v1456
    %v1825 = vunpack.c.l.b16 %v1457
    %v1826 = vpack.c.b16 %v1811, %v1810
    %v1827 = vpack.c.b16 %v1813, %v1812
    %v1828 = vpack.c.b16 %v1815, %v1814
    %v1829 = vpack.c.b16 %v1817, %v1816
    %v1830 = vpack.c.b16 %v1819, %v1818
    %v1831 = vpack.c.b16 %v1821, %v1820
    %v1832 = vpack.c.b16 %v1823, %v1822
    %v1833 = vpack.c.b16 %v1825, %v1824
    %1842 = vmatprep.subr.bf16.mxu0 0
    %1843 = vmatpush1.bf16.msra.mxu0 %v1826
    %1844 = vmatprep.subr.bf16.mxu0 0
    %1845 = vmatpush1.bf16.msra.mxu0 %v1827
    %1846 = vmatprep.subr.bf16.mxu0 0
    %1847 = vmatpush1.bf16.msra.mxu0 %v1828
    %1848 = vmatprep.subr.bf16.mxu0 0
    %1849 = vmatpush1.bf16.msra.mxu0 %v1829
    %1850 = vmatprep.subr.bf16.mxu0 0
    %1851 = vmatpush1.bf16.msra.mxu0 %v1830
    %1852 = vmatprep.subr.bf16.mxu0 0
    %1853 = vmatpush1.bf16.msra.mxu0 %v1831
    %1854 = vmatprep.subr.bf16.mxu0 0
    %1855 = vmatpush1.bf16.msra.mxu0 %v1832
    %1856 = vmatprep.subr.bf16.mxu0 0
    %1857 = vmatpush1.bf16.msra.mxu0 %v1833
    %1858 = vmatprep.subr.bf16.mxu0 0
    %1859 = vmatpush1.bf16.msra.mxu0 0
    %1860 = vmatprep.subr.bf16.mxu0 0
    %1861 = vmatpush1.bf16.msra.mxu0 0
    %1862 = vmatprep.subr.bf16.mxu0 0
    %1863 = vmatpush1.bf16.msra.mxu0 0
    %1864 = vmatprep.subr.bf16.mxu0 0
    %1865 = vmatpush1.bf16.msra.mxu0 0
    %1866 = vmatprep.subr.bf16.mxu0 0
    %1867 = vmatpush1.bf16.msra.mxu0 0
    %1868 = vmatprep.subr.bf16.mxu0 0
    %1869 = vmatpush1.bf16.msra.mxu0 0
    %1870 = vmatprep.subr.bf16.mxu0 0
    %1871 = vmatpush1.bf16.msra.mxu0 0
    %1872 = vmatprep.subr.bf16.mxu0 0
    %1873 = vmatpush1.bf16.msra.mxu0 0
    %1874 = vmatprep.mubr.bf16.mxu0 0
    %1875 = vmatmul.mubr.bf16.gmra.mrb[0].mxu0 %v319
    %v1876 = vpop.f32.mrb[0].mxu0
    %v1877 = vadd.f32 %v1789, %v1876
    %v1878 = vpop.f32.mrb[0].mxu0
    %v1879 = vpop.f32.mrb[0].mxu0
    %v1880 = vpop.f32.mrb[0].mxu0
    %1881 = vdwg.mxu0
    %v1882 = vld [vmem:[%s11] sm:$0x1]
    %v1884 = vlaneseq
    %v1885 = vshrl.u32 %v1884, 7
    %v1886 = vsub.s32 0, %v1885
    %v1887 = vrot.slane %v1882, %v1886
    %v1889 = vadd.f32 %v1877, %v1887
    %v1890 = vlaneseq
    %v1891 = vand.u32 %v1890, 127
    %vm1892 = vcmp.ge.s32.totalorder %v1891, 17
    %vm1893 = vcmp.lt.s32.totalorder %v1891, 19
    %vm1894 = vmand %vm1892, %vm1893
    %v1895 = vsel %vm1894, %v1889, -1e+30
    %1896 = vmax.xlane.f32.xlu0 %v1895
    %v1897 = vpop.xlane.xlu0 %1896
    %v1898 = vsub.f32 %v1895, %v1897
    %v1899 = vmul.f32 %v1898, 1.442695
    %v1900 = vpow.pop %v1899
    %v1901 = vsel %vm1894, %v1900, 0.0
    %1902 = vadd.xlane.f32.xlu0 %v1901
    %v1903 = vpop.xlane.xlu0 %1902
    %v1904 = vrcp.pop %v1903
    %v1905 = vmul.f32 %v1901, %v1904
    %vm1906 = vcmp.lt.s32.totalorder %v1891, 16
    %v1907 = vtanh.pop %v1889
    %vm1908 = vcmp.eq.s32.totalorder %v1891, 16
    %v1909 = vsel %vm1908, %v1889, %v1905
    %v1910 = vsel %vm1906, %v1907, %v1909
    %1911 = vst [vmem:[#allocation14] sm:$0xff] %v1910
    // Predicated region
    $region78: #{tpu_custom_call.1} parent=1 // pred_check
      _
    $region79: #{tpu_custom_call.1} parent=1 // pred_check_branch
      %1913 = sbr.rel (0) target = $region81
    $region80: #{tpu_custom_call.1} parent=1 // pred_region
      %s1915 = ssub.s32 128, 128
      %1916 = vsyncadd [#allocation4], %s1915
      %s1918 = sshll.u32 [#allocation14], 4
      %s1919 = int_to_ptr.vmem [resolvable:$true] %s1918
      %1921 = dma.vmem_to_hbm [thread:$0]  %s1919, 128, %s12, [#allocation4]
    $region81: #{tpu_custom_call.1} parent=1 // pred_fallthru
      _
    // Predicated region
    $region82: #{tpu_custom_call.1} parent=1 // pred_check
      _
    $region83: #{tpu_custom_call.1} parent=1 // pred_check_branch
      %1923 = sbr.rel (0) target = $region85
    $region84: #{tpu_custom_call.1} parent=1 // pred_region
      %1924 = dma.done [#allocation4], 128
    $region85: #{tpu_custom_call.1} parent=1 // pred_fallthru
      _
    %1925 = vsyncpa [#allocation3], 1
    %1926 = vsyncpa [#allocation6], 1
    %1927 = vsyncpa [#allocation9], 1
    %1928 = vsyncpa [#allocation12], 1
    %1929 = vsyncpa [#allocation4], 1

</llo_original>
